<compile_context>
chip_gen: v5e
topology: v5e:2x2
jax: 0.10.0
libtpu: 0.0.40
codegen_flags: <defaults>
</compile_context>

<pallas_src>
from functools import partial

import jax
import jax.numpy as jnp
from jax.experimental import pallas as pl
from jax.experimental.pallas import tpu as pltpu

C = 3        # in_channels == out_channels == 3
KH = KW = 3  # kernel_size = 3, stride = 1, padding = 1

_TAPS = tuple((dy, dx) for dy in (-1, 0, 1) for dx in (-1, 0, 1) if (dy, dx) != (0, 0))


def _default_compute_dtype():
    """bf16 on chips with a bf16 VALU (v6e / v7x); f32 elsewhere (v5e and older)."""
    try:
        kind = jax.devices()[0].device_kind.lower()
    except Exception:
        return jnp.float32
    return jnp.bfloat16 if any(t in kind for t in ("v6", "v7", "7x")) else jnp.float32


def _pick_batch_tile(n):
    """Batch rows per grid step (sublane dim of each block)."""
    if n <= 8:
        return n                       # single tiny block (equals full array dim)
    nb = -(-n // 2)                    # cdiv(n, 2): >=2 grid steps -> both v7x TCs busy
    nb = -(-nb // 8) * 8               # round up to a sublane multiple
    return min(64, nb)                 # cap: <10% per-step overhead, blocks << VMEM


def _build_boundary_masks(h, w, dtype):
    """(8, H*W) validity masks: 1 inside the image, 0 in the SAME-padding region."""
    pos = jnp.arange(h * w, dtype=jnp.int32)
    row, col = pos // w, pos % w
    rows = []
    for dy, dx in _TAPS:
        valid = ((row + dy >= 0) & (row + dy < h) &
                 (col + dx >= 0) & (col + dx < w))
        rows.append(valid.astype(dtype))
    return jnp.stack(rows, axis=0)


def residual_block_cnl(x_cnl, w1, b1, w2, b2, *, H, W):
    """Residual block on the canonical (C, N, H*W) activation layout (compute dtype)."""
    Cc, N, HW = x_cnl.shape
    assert Cc == C and HW == H * W
    assert HW % 128 == 0, "flattened spatial axis must be lane-dense (multiple of 128)"
    cdt = x_cnl.dtype
    NB = _pick_batch_tile(N)
    grid = (pl.cdiv(N, NB),)
    masks_in = _build_boundary_masks(H, W, cdt)

    def conv3x3(chans, w_ref, masks):
        # chans: list of C arrays of shape (NB, HW). Returns C accumulators (no bias).
        accs = [None] * C
        for dy, dx in ((0, 0),) + _TAPS:
            d = dy * W + dx
            ky, kx = dy + 1, dx + 1
            for ci in range(C):
                s = chans[ci]
                if d != 0:
                    # s[p] = chans[ci][p + d], zeroed outside the image.
                    s = pltpu.roll(s, (-d) % HW, 1) * masks[(dy, dx)]
                # Reuse the shifted slice for all output channels.
                for co in range(C):
                    wv = w_ref[((co * C + ci) * KH + ky) * KW + kx].astype(cdt)
                    t = wv * s
                    accs[co] = t if accs[co] is None else accs[co] + t
        return accs

    def kernel(x_ref, m_ref, w1_ref, b1_ref, w2_ref, b2_ref, o_ref):
        # Hoisted boundary masks: exactly one broadcast per tap, reused by both convs.
        masks = {t: jnp.broadcast_to(m_ref[i:i + 1, :], (NB, HW))
                 for i, t in enumerate(_TAPS)}
        xs = [x_ref[ci] for ci in range(C)]               # C x (NB, HW), lane-dense
        # conv1; bias folded into the ReLU epilogue
        a1 = conv3x3(xs, w1_ref, masks)
        hs = [jnp.maximum(a1[co] + b1_ref[co].astype(cdt), 0.0) for co in range(C)]
        # conv2 + bias + ReLU + fused residual add; dense lane stores
        a2 = conv3x3(hs, w2_ref, masks)
        for co in range(C):
            o_ref[co] = jnp.maximum(a2[co] + b2_ref[co].astype(cdt), 0.0) + xs[co]

    # Right-size the scoped-VMEM override from the actual block bytes; only set it when
    # the double-buffered in+out blocks (+masks, +intermediate headroom) outgrow the most
    # conservative 16 MiB default (never at NB<=64).  v7x only has 64 MiB physical VMEM.
    block_bytes = C * NB * HW * jnp.dtype(cdt).itemsize
    need = 4 * block_bytes + 2 * masks_in.size * masks_in.dtype.itemsize + (4 << 20)
    cp = dict(dimension_semantics=("parallel",))          # megacore-shard batch tiles
    if need > (16 << 20):
        cp["vmem_limit_bytes"] = min(need, 64 << 20)

    return pl.pallas_call(
        kernel,
        out_shape=jax.ShapeDtypeStruct((Cc, N, HW), cdt),
        grid=grid,
        in_specs=[
            pl.BlockSpec((Cc, NB, HW), lambda n: (0, n, 0)),       # activations
            pl.BlockSpec((len(_TAPS), HW), lambda n: (0, 0)),      # boundary masks
            pl.BlockSpec(memory_space=pltpu.MemorySpace.SMEM),     # w1 (flat, 81)
            pl.BlockSpec(memory_space=pltpu.MemorySpace.SMEM),     # b1
            pl.BlockSpec(memory_space=pltpu.MemorySpace.SMEM),     # w2 (flat, 81)
            pl.BlockSpec(memory_space=pltpu.MemorySpace.SMEM),     # b2
        ],
        out_specs=pl.BlockSpec((Cc, NB, HW), lambda n: (0, n, 0)),
        compiler_params=pltpu.CompilerParams(**cp),
    )(x_cnl, masks_in,
      w1.reshape(-1).astype(jnp.float32), b1.astype(jnp.float32),
      w2.reshape(-1).astype(jnp.float32), b2.astype(jnp.float32))


@partial(jax.jit, static_argnames=("compute_dtype",))
def simple_residual_block(x, w1, b1, w2, b2, compute_dtype=None):
    """NCHW convenience wrapper matching the PyTorch module's signature.

    NOTE: the NCHW <-> (C, N, H*W) relayouts here are two extra HBM passes around a
    kernel whose own HBM traffic is one read + one write.  In a real pipeline keep the
    canonical (C, N, H*W) layout across op boundaries and call residual_block_cnl
    directly; this wrapper exists for drop-in use of the module in isolation.
    """
    N, Cc, H, W = x.shape
    cdt = compute_dtype if compute_dtype is not None else _default_compute_dtype()
    x_cnl = jnp.transpose(x, (1, 0, 2, 3)).reshape(Cc, N, H * W).astype(cdt)
    out = residual_block_cnl(x_cnl, w1, b1, w2, b2, H=H, W=W)
    return out.reshape(Cc, N, H, W).transpose(1, 0, 2, 3).astype(x.dtype)


def reference(x, w1, b1, w2, b2):
    """Pure-JAX reference of the PyTorch forward (NCHW / OIHW)."""
    def conv(inp, w, b):
        y = jax.lax.conv_general_dilated(
            inp, w, window_strides=(1, 1), padding="SAME",
            dimension_numbers=("NCHW", "OIHW", "NCHW"))
        return y + b[None, :, None, None]
    out = jax.nn.relu(conv(x, w1, b1))
    out = jax.nn.relu(conv(out, w2, b2))
    return out + x


if __name__ == "__main__":
    key = jax.random.PRNGKey(0)
    kx, k1w, k1b, k2w, k2b = jax.random.split(key, 5)

    N, H, W = 2, 16, 16
    x = jax.random.normal(kx, (N, C, H, W), dtype=jnp.float32)

    # Deterministic parameter init (PyTorch-style uniform bound 1/sqrt(fan_in)).
    fan_in = C * KH * KW
    bound = 1.0 / float(fan_in) ** 0.5
    w1 = jax.random.uniform(k1w, (C, C, KH, KW), jnp.float32, -bound, bound)
    b1 = jax.random.uniform(k1b, (C,), jnp.float32, -bound, bound)
    w2 = jax.random.uniform(k2w, (C, C, KH, KW), jnp.float32, -bound, bound)
    b2 = jax.random.uniform(k2b, (C,), jnp.float32, -bound, bound)

    ref = jax.block_until_ready(reference(x, w1, b1, w2, b2))

    # 1) f32 compute path (all TPU generations) -- tight check vs the conv reference.
    out = jax.block_until_ready(
        simple_residual_block(x, w1, b1, w2, b2, compute_dtype=jnp.float32))
    assert out.shape == x.shape and out.dtype == jnp.float32
    assert float(jnp.max(jnp.abs(out - ref))) < 1e-4, "f32 mismatch vs reference conv"

    # 2) device-default path (bf16 MACs on v6e/v7x, f32 elsewhere) -- looser tolerance.
    cdt = _default_compute_dtype()
    out_dev = jax.block_until_ready(simple_residual_block(x, w1, b1, w2, b2))
    tol = 1e-4 if cdt == jnp.float32 else 5e-2
    assert float(jnp.max(jnp.abs(out_dev - ref))) < tol, "device-dtype mismatch"

    # 3) Multi-tile path: batch large enough to exercise grid > 1 and a ragged block.
    N2 = 24
    x2 = jax.random.normal(jax.random.PRNGKey(1), (N2, C, H, W), dtype=jnp.float32)
    ref2 = jax.block_until_ready(reference(x2, w1, b1, w2, b2))
    out2 = jax.block_until_ready(
        simple_residual_block(x2, w1, b1, w2, b2, compute_dtype=jnp.float32))
    assert float(jnp.max(jnp.abs(out2 - ref2))) < 1e-4, "multi-tile mismatch"

    print("KERNEL_OK")
</pallas_src>

<mosaic_0001>
module attributes {stable_mosaic.version = 11 : i64} {
  func.func @kernel(%arg0: i32, %arg1: memref<3x2x256xf32, #tpu.memory_space<vmem>>, %arg2: memref<8x256xf32, #tpu.memory_space<vmem>>, %arg3: memref<81xf32, #tpu.memory_space<smem>>, %arg4: memref<3xf32, #tpu.memory_space<smem>>, %arg5: memref<81xf32, #tpu.memory_space<smem>>, %arg6: memref<3xf32, #tpu.memory_space<smem>>, %arg7: memref<3x2x256xf32, #tpu.memory_space<vmem>>) attributes {dimension_semantics = [#tpu.dimension_semantics<parallel>], iteration_bounds = array<i64: 1>, scalar_prefetch = 0 : i64, scratch_operands = 0 : i64, tpu.core_type = #tpu.core_type<tc>, window_params = [{transform_indices = @transform_0, window_bounds = array<i64: 3, 2, 256>}, {pipeline_mode = #tpu.pipeline_mode<synchronous>, transform_indices = @transform_1, window_bounds = array<i64: 8, 256>}, {transform_indices = @transform_2, window_bounds = array<i64: 81>}, {transform_indices = @transform_3, window_bounds = array<i64: 3>}, {transform_indices = @transform_4, window_bounds = array<i64: 81>}, {transform_indices = @transform_5, window_bounds = array<i64: 3>}, {transform_indices = @transform_6, window_bounds = array<i64: 3, 2, 256>}]} {
    %c0 = arith.constant 0 : index
    %c0_0 = arith.constant 0 : index
    %0 = vector.load %arg2[%c0, %c0_0] : memref<8x256xf32, #tpu.memory_space<vmem>>, vector<1x256xf32>
    %1 = vector.shape_cast %0 : vector<1x256xf32> to vector<1x256xf32>
    %2 = vector.broadcast %1 : vector<1x256xf32> to vector<2x256xf32>
    %c1 = arith.constant 1 : index
    %c0_1 = arith.constant 0 : index
    %3 = vector.load %arg2[%c1, %c0_1] : memref<8x256xf32, #tpu.memory_space<vmem>>, vector<1x256xf32>
    %4 = vector.shape_cast %3 : vector<1x256xf32> to vector<1x256xf32>
    %5 = vector.broadcast %4 : vector<1x256xf32> to vector<2x256xf32>
    %c2 = arith.constant 2 : index
    %c0_2 = arith.constant 0 : index
    %6 = vector.load %arg2[%c2, %c0_2] : memref<8x256xf32, #tpu.memory_space<vmem>>, vector<1x256xf32>
    %7 = vector.shape_cast %6 : vector<1x256xf32> to vector<1x256xf32>
    %8 = vector.broadcast %7 : vector<1x256xf32> to vector<2x256xf32>
    %c3 = arith.constant 3 : index
    %c0_3 = arith.constant 0 : index
    %9 = vector.load %arg2[%c3, %c0_3] : memref<8x256xf32, #tpu.memory_space<vmem>>, vector<1x256xf32>
    %10 = vector.shape_cast %9 : vector<1x256xf32> to vector<1x256xf32>
    %11 = vector.broadcast %10 : vector<1x256xf32> to vector<2x256xf32>
    %c4 = arith.constant 4 : index
    %c0_4 = arith.constant 0 : index
    %12 = vector.load %arg2[%c4, %c0_4] : memref<8x256xf32, #tpu.memory_space<vmem>>, vector<1x256xf32>
    %13 = vector.shape_cast %12 : vector<1x256xf32> to vector<1x256xf32>
    %14 = vector.broadcast %13 : vector<1x256xf32> to vector<2x256xf32>
    %c5 = arith.constant 5 : index
    %c0_5 = arith.constant 0 : index
    %15 = vector.load %arg2[%c5, %c0_5] : memref<8x256xf32, #tpu.memory_space<vmem>>, vector<1x256xf32>
    %16 = vector.shape_cast %15 : vector<1x256xf32> to vector<1x256xf32>
    %17 = vector.broadcast %16 : vector<1x256xf32> to vector<2x256xf32>
    %c6 = arith.constant 6 : index
    %c0_6 = arith.constant 0 : index
    %18 = vector.load %arg2[%c6, %c0_6] : memref<8x256xf32, #tpu.memory_space<vmem>>, vector<1x256xf32>
    %19 = vector.shape_cast %18 : vector<1x256xf32> to vector<1x256xf32>
    %20 = vector.broadcast %19 : vector<1x256xf32> to vector<2x256xf32>
    %c7 = arith.constant 7 : index
    %c0_7 = arith.constant 0 : index
    %21 = vector.load %arg2[%c7, %c0_7] : memref<8x256xf32, #tpu.memory_space<vmem>>, vector<1x256xf32>
    %22 = vector.shape_cast %21 : vector<1x256xf32> to vector<1x256xf32>
    %23 = vector.broadcast %22 : vector<1x256xf32> to vector<2x256xf32>
    %c0_8 = arith.constant 0 : index
    %c0_9 = arith.constant 0 : index
    %c0_10 = arith.constant 0 : index
    %24 = vector.load %arg1[%c0_8, %c0_9, %c0_10] : memref<3x2x256xf32, #tpu.memory_space<vmem>>, vector<1x2x256xf32>
    %25 = vector.shape_cast %24 : vector<1x2x256xf32> to vector<2x256xf32>
    %c1_11 = arith.constant 1 : index
    %c0_12 = arith.constant 0 : index
    %c0_13 = arith.constant 0 : index
    %26 = vector.load %arg1[%c1_11, %c0_12, %c0_13] : memref<3x2x256xf32, #tpu.memory_space<vmem>>, vector<1x2x256xf32>
    %27 = vector.shape_cast %26 : vector<1x2x256xf32> to vector<2x256xf32>
    %c2_14 = arith.constant 2 : index
    %c0_15 = arith.constant 0 : index
    %c0_16 = arith.constant 0 : index
    %28 = vector.load %arg1[%c2_14, %c0_15, %c0_16] : memref<3x2x256xf32, #tpu.memory_space<vmem>>, vector<1x2x256xf32>
    %29 = vector.shape_cast %28 : vector<1x2x256xf32> to vector<2x256xf32>
    %c4_17 = arith.constant 4 : index
    %30 = memref.load %arg3[%c4_17] : memref<81xf32, #tpu.memory_space<smem>>
    %31 = vector.broadcast %30 : f32 to vector<2x256xf32>
    %32 = arith.mulf %31, %25 : vector<2x256xf32>
    %c31 = arith.constant 31 : index
    %33 = memref.load %arg3[%c31] : memref<81xf32, #tpu.memory_space<smem>>
    %34 = vector.broadcast %33 : f32 to vector<2x256xf32>
    %35 = arith.mulf %34, %25 : vector<2x256xf32>
    %c58 = arith.constant 58 : index
    %36 = memref.load %arg3[%c58] : memref<81xf32, #tpu.memory_space<smem>>
    %37 = vector.broadcast %36 : f32 to vector<2x256xf32>
    %38 = arith.mulf %37, %25 : vector<2x256xf32>
    %c13 = arith.constant 13 : index
    %39 = memref.load %arg3[%c13] : memref<81xf32, #tpu.memory_space<smem>>
    %40 = vector.broadcast %39 : f32 to vector<2x256xf32>
    %41 = arith.mulf %40, %27 : vector<2x256xf32>
    %42 = arith.addf %32, %41 : vector<2x256xf32>
    %c40 = arith.constant 40 : index
    %43 = memref.load %arg3[%c40] : memref<81xf32, #tpu.memory_space<smem>>
    %44 = vector.broadcast %43 : f32 to vector<2x256xf32>
    %45 = arith.mulf %44, %27 : vector<2x256xf32>
    %46 = arith.addf %35, %45 : vector<2x256xf32>
    %c67 = arith.constant 67 : index
    %47 = memref.load %arg3[%c67] : memref<81xf32, #tpu.memory_space<smem>>
    %48 = vector.broadcast %47 : f32 to vector<2x256xf32>
    %49 = arith.mulf %48, %27 : vector<2x256xf32>
    %50 = arith.addf %38, %49 : vector<2x256xf32>
    %c22 = arith.constant 22 : index
    %51 = memref.load %arg3[%c22] : memref<81xf32, #tpu.memory_space<smem>>
    %52 = vector.broadcast %51 : f32 to vector<2x256xf32>
    %53 = arith.mulf %52, %29 : vector<2x256xf32>
    %54 = arith.addf %42, %53 : vector<2x256xf32>
    %c49 = arith.constant 49 : index
    %55 = memref.load %arg3[%c49] : memref<81xf32, #tpu.memory_space<smem>>
    %56 = vector.broadcast %55 : f32 to vector<2x256xf32>
    %57 = arith.mulf %56, %29 : vector<2x256xf32>
    %58 = arith.addf %46, %57 : vector<2x256xf32>
    %c76 = arith.constant 76 : index
    %59 = memref.load %arg3[%c76] : memref<81xf32, #tpu.memory_space<smem>>
    %60 = vector.broadcast %59 : f32 to vector<2x256xf32>
    %61 = arith.mulf %60, %29 : vector<2x256xf32>
    %62 = arith.addf %50, %61 : vector<2x256xf32>
    %c17_i32 = arith.constant 17 : i32
    %63 = tpu.dynamic_rotate %25 by %c17_i32 dim 1 : vector<2x256xf32>, i32 -> vector<2x256xf32>
    %64 = arith.mulf %63, %2 : vector<2x256xf32>
    %c0_18 = arith.constant 0 : index
    %65 = memref.load %arg3[%c0_18] : memref<81xf32, #tpu.memory_space<smem>>
    %66 = vector.broadcast %65 : f32 to vector<2x256xf32>
    %67 = arith.mulf %66, %64 : vector<2x256xf32>
    %68 = arith.addf %54, %67 : vector<2x256xf32>
    %c27 = arith.constant 27 : index
    %69 = memref.load %arg3[%c27] : memref<81xf32, #tpu.memory_space<smem>>
    %70 = vector.broadcast %69 : f32 to vector<2x256xf32>
    %71 = arith.mulf %70, %64 : vector<2x256xf32>
    %72 = arith.addf %58, %71 : vector<2x256xf32>
    %c54 = arith.constant 54 : index
    %73 = memref.load %arg3[%c54] : memref<81xf32, #tpu.memory_space<smem>>
    %74 = vector.broadcast %73 : f32 to vector<2x256xf32>
    %75 = arith.mulf %74, %64 : vector<2x256xf32>
    %76 = arith.addf %62, %75 : vector<2x256xf32>
    %c17_i32_19 = arith.constant 17 : i32
    %77 = tpu.dynamic_rotate %27 by %c17_i32_19 dim 1 : vector<2x256xf32>, i32 -> vector<2x256xf32>
    %78 = arith.mulf %77, %2 : vector<2x256xf32>
    %c9 = arith.constant 9 : index
    %79 = memref.load %arg3[%c9] : memref<81xf32, #tpu.memory_space<smem>>
    %80 = vector.broadcast %79 : f32 to vector<2x256xf32>
    %81 = arith.mulf %80, %78 : vector<2x256xf32>
    %82 = arith.addf %68, %81 : vector<2x256xf32>
    %c36 = arith.constant 36 : index
    %83 = memref.load %arg3[%c36] : memref<81xf32, #tpu.memory_space<smem>>
    %84 = vector.broadcast %83 : f32 to vector<2x256xf32>
    %85 = arith.mulf %84, %78 : vector<2x256xf32>
    %86 = arith.addf %72, %85 : vector<2x256xf32>
    %c63 = arith.constant 63 : index
    %87 = memref.load %arg3[%c63] : memref<81xf32, #tpu.memory_space<smem>>
    %88 = vector.broadcast %87 : f32 to vector<2x256xf32>
    %89 = arith.mulf %88, %78 : vector<2x256xf32>
    %90 = arith.addf %76, %89 : vector<2x256xf32>
    %c17_i32_20 = arith.constant 17 : i32
    %91 = tpu.dynamic_rotate %29 by %c17_i32_20 dim 1 : vector<2x256xf32>, i32 -> vector<2x256xf32>
    %92 = arith.mulf %91, %2 : vector<2x256xf32>
    %c18 = arith.constant 18 : index
    %93 = memref.load %arg3[%c18] : memref<81xf32, #tpu.memory_space<smem>>
    %94 = vector.broadcast %93 : f32 to vector<2x256xf32>
    %95 = arith.mulf %94, %92 : vector<2x256xf32>
    %96 = arith.addf %82, %95 : vector<2x256xf32>
    %c45 = arith.constant 45 : index
    %97 = memref.load %arg3[%c45] : memref<81xf32, #tpu.memory_space<smem>>
    %98 = vector.broadcast %97 : f32 to vector<2x256xf32>
    %99 = arith.mulf %98, %92 : vector<2x256xf32>
    %100 = arith.addf %86, %99 : vector<2x256xf32>
    %c72 = arith.constant 72 : index
    %101 = memref.load %arg3[%c72] : memref<81xf32, #tpu.memory_space<smem>>
    %102 = vector.broadcast %101 : f32 to vector<2x256xf32>
    %103 = arith.mulf %102, %92 : vector<2x256xf32>
    %104 = arith.addf %90, %103 : vector<2x256xf32>
    %c16_i32 = arith.constant 16 : i32
    %105 = tpu.dynamic_rotate %25 by %c16_i32 dim 1 : vector<2x256xf32>, i32 -> vector<2x256xf32>
    %106 = arith.mulf %105, %5 : vector<2x256xf32>
    %c1_21 = arith.constant 1 : index
    %107 = memref.load %arg3[%c1_21] : memref<81xf32, #tpu.memory_space<smem>>
    %108 = vector.broadcast %107 : f32 to vector<2x256xf32>
    %109 = arith.mulf %108, %106 : vector<2x256xf32>
    %110 = arith.addf %96, %109 : vector<2x256xf32>
    %c28 = arith.constant 28 : index
    %111 = memref.load %arg3[%c28] : memref<81xf32, #tpu.memory_space<smem>>
    %112 = vector.broadcast %111 : f32 to vector<2x256xf32>
    %113 = arith.mulf %112, %106 : vector<2x256xf32>
    %114 = arith.addf %100, %113 : vector<2x256xf32>
    %c55 = arith.constant 55 : index
    %115 = memref.load %arg3[%c55] : memref<81xf32, #tpu.memory_space<smem>>
    %116 = vector.broadcast %115 : f32 to vector<2x256xf32>
    %117 = arith.mulf %116, %106 : vector<2x256xf32>
    %118 = arith.addf %104, %117 : vector<2x256xf32>
    %c16_i32_22 = arith.constant 16 : i32
    %119 = tpu.dynamic_rotate %27 by %c16_i32_22 dim 1 : vector<2x256xf32>, i32 -> vector<2x256xf32>
    %120 = arith.mulf %119, %5 : vector<2x256xf32>
    %c10 = arith.constant 10 : index
    %121 = memref.load %arg3[%c10] : memref<81xf32, #tpu.memory_space<smem>>
    %122 = vector.broadcast %121 : f32 to vector<2x256xf32>
    %123 = arith.mulf %122, %120 : vector<2x256xf32>
    %124 = arith.addf %110, %123 : vector<2x256xf32>
    %c37 = arith.constant 37 : index
    %125 = memref.load %arg3[%c37] : memref<81xf32, #tpu.memory_space<smem>>
    %126 = vector.broadcast %125 : f32 to vector<2x256xf32>
    %127 = arith.mulf %126, %120 : vector<2x256xf32>
    %128 = arith.addf %114, %127 : vector<2x256xf32>
    %c64 = arith.constant 64 : index
    %129 = memref.load %arg3[%c64] : memref<81xf32, #tpu.memory_space<smem>>
    %130 = vector.broadcast %129 : f32 to vector<2x256xf32>
    %131 = arith.mulf %130, %120 : vector<2x256xf32>
    %132 = arith.addf %118, %131 : vector<2x256xf32>
    %c16_i32_23 = arith.constant 16 : i32
    %133 = tpu.dynamic_rotate %29 by %c16_i32_23 dim 1 : vector<2x256xf32>, i32 -> vector<2x256xf32>
    %134 = arith.mulf %133, %5 : vector<2x256xf32>
    %c19 = arith.constant 19 : index
    %135 = memref.load %arg3[%c19] : memref<81xf32, #tpu.memory_space<smem>>
    %136 = vector.broadcast %135 : f32 to vector<2x256xf32>
    %137 = arith.mulf %136, %134 : vector<2x256xf32>
    %138 = arith.addf %124, %137 : vector<2x256xf32>
    %c46 = arith.constant 46 : index
    %139 = memref.load %arg3[%c46] : memref<81xf32, #tpu.memory_space<smem>>
    %140 = vector.broadcast %139 : f32 to vector<2x256xf32>
    %141 = arith.mulf %140, %134 : vector<2x256xf32>
    %142 = arith.addf %128, %141 : vector<2x256xf32>
    %c73 = arith.constant 73 : index
    %143 = memref.load %arg3[%c73] : memref<81xf32, #tpu.memory_space<smem>>
    %144 = vector.broadcast %143 : f32 to vector<2x256xf32>
    %145 = arith.mulf %144, %134 : vector<2x256xf32>
    %146 = arith.addf %132, %145 : vector<2x256xf32>
    %c15_i32 = arith.constant 15 : i32
    %147 = tpu.dynamic_rotate %25 by %c15_i32 dim 1 : vector<2x256xf32>, i32 -> vector<2x256xf32>
    %148 = arith.mulf %147, %8 : vector<2x256xf32>
    %c2_24 = arith.constant 2 : index
    %149 = memref.load %arg3[%c2_24] : memref<81xf32, #tpu.memory_space<smem>>
    %150 = vector.broadcast %149 : f32 to vector<2x256xf32>
    %151 = arith.mulf %150, %148 : vector<2x256xf32>
    %152 = arith.addf %138, %151 : vector<2x256xf32>
    %c29 = arith.constant 29 : index
    %153 = memref.load %arg3[%c29] : memref<81xf32, #tpu.memory_space<smem>>
    %154 = vector.broadcast %153 : f32 to vector<2x256xf32>
    %155 = arith.mulf %154, %148 : vector<2x256xf32>
    %156 = arith.addf %142, %155 : vector<2x256xf32>
    %c56 = arith.constant 56 : index
    %157 = memref.load %arg3[%c56] : memref<81xf32, #tpu.memory_space<smem>>
    %158 = vector.broadcast %157 : f32 to vector<2x256xf32>
    %159 = arith.mulf %158, %148 : vector<2x256xf32>
    %160 = arith.addf %146, %159 : vector<2x256xf32>
    %c15_i32_25 = arith.constant 15 : i32
    %161 = tpu.dynamic_rotate %27 by %c15_i32_25 dim 1 : vector<2x256xf32>, i32 -> vector<2x256xf32>
    %162 = arith.mulf %161, %8 : vector<2x256xf32>
    %c11 = arith.constant 11 : index
    %163 = memref.load %arg3[%c11] : memref<81xf32, #tpu.memory_space<smem>>
    %164 = vector.broadcast %163 : f32 to vector<2x256xf32>
    %165 = arith.mulf %164, %162 : vector<2x256xf32>
    %166 = arith.addf %152, %165 : vector<2x256xf32>
    %c38 = arith.constant 38 : index
    %167 = memref.load %arg3[%c38] : memref<81xf32, #tpu.memory_space<smem>>
    %168 = vector.broadcast %167 : f32 to vector<2x256xf32>
    %169 = arith.mulf %168, %162 : vector<2x256xf32>
    %170 = arith.addf %156, %169 : vector<2x256xf32>
    %c65 = arith.constant 65 : index
    %171 = memref.load %arg3[%c65] : memref<81xf32, #tpu.memory_space<smem>>
    %172 = vector.broadcast %171 : f32 to vector<2x256xf32>
    %173 = arith.mulf %172, %162 : vector<2x256xf32>
    %174 = arith.addf %160, %173 : vector<2x256xf32>
    %c15_i32_26 = arith.constant 15 : i32
    %175 = tpu.dynamic_rotate %29 by %c15_i32_26 dim 1 : vector<2x256xf32>, i32 -> vector<2x256xf32>
    %176 = arith.mulf %175, %8 : vector<2x256xf32>
    %c20 = arith.constant 20 : index
    %177 = memref.load %arg3[%c20] : memref<81xf32, #tpu.memory_space<smem>>
    %178 = vector.broadcast %177 : f32 to vector<2x256xf32>
    %179 = arith.mulf %178, %176 : vector<2x256xf32>
    %180 = arith.addf %166, %179 : vector<2x256xf32>
    %c47 = arith.constant 47 : index
    %181 = memref.load %arg3[%c47] : memref<81xf32, #tpu.memory_space<smem>>
    %182 = vector.broadcast %181 : f32 to vector<2x256xf32>
    %183 = arith.mulf %182, %176 : vector<2x256xf32>
    %184 = arith.addf %170, %183 : vector<2x256xf32>
    %c74 = arith.constant 74 : index
    %185 = memref.load %arg3[%c74] : memref<81xf32, #tpu.memory_space<smem>>
    %186 = vector.broadcast %185 : f32 to vector<2x256xf32>
    %187 = arith.mulf %186, %176 : vector<2x256xf32>
    %188 = arith.addf %174, %187 : vector<2x256xf32>
    %c1_i32 = arith.constant 1 : i32
    %189 = tpu.dynamic_rotate %25 by %c1_i32 dim 1 : vector<2x256xf32>, i32 -> vector<2x256xf32>
    %190 = arith.mulf %189, %11 : vector<2x256xf32>
    %c3_27 = arith.constant 3 : index
    %191 = memref.load %arg3[%c3_27] : memref<81xf32, #tpu.memory_space<smem>>
    %192 = vector.broadcast %191 : f32 to vector<2x256xf32>
    %193 = arith.mulf %192, %190 : vector<2x256xf32>
    %194 = arith.addf %180, %193 : vector<2x256xf32>
    %c30 = arith.constant 30 : index
    %195 = memref.load %arg3[%c30] : memref<81xf32, #tpu.memory_space<smem>>
    %196 = vector.broadcast %195 : f32 to vector<2x256xf32>
    %197 = arith.mulf %196, %190 : vector<2x256xf32>
    %198 = arith.addf %184, %197 : vector<2x256xf32>
    %c57 = arith.constant 57 : index
    %199 = memref.load %arg3[%c57] : memref<81xf32, #tpu.memory_space<smem>>
    %200 = vector.broadcast %199 : f32 to vector<2x256xf32>
    %201 = arith.mulf %200, %190 : vector<2x256xf32>
    %202 = arith.addf %188, %201 : vector<2x256xf32>
    %c1_i32_28 = arith.constant 1 : i32
    %203 = tpu.dynamic_rotate %27 by %c1_i32_28 dim 1 : vector<2x256xf32>, i32 -> vector<2x256xf32>
    %204 = arith.mulf %203, %11 : vector<2x256xf32>
    %c12 = arith.constant 12 : index
    %205 = memref.load %arg3[%c12] : memref<81xf32, #tpu.memory_space<smem>>
    %206 = vector.broadcast %205 : f32 to vector<2x256xf32>
    %207 = arith.mulf %206, %204 : vector<2x256xf32>
    %208 = arith.addf %194, %207 : vector<2x256xf32>
    %c39 = arith.constant 39 : index
    %209 = memref.load %arg3[%c39] : memref<81xf32, #tpu.memory_space<smem>>
    %210 = vector.broadcast %209 : f32 to vector<2x256xf32>
    %211 = arith.mulf %210, %204 : vector<2x256xf32>
    %212 = arith.addf %198, %211 : vector<2x256xf32>
    %c66 = arith.constant 66 : index
    %213 = memref.load %arg3[%c66] : memref<81xf32, #tpu.memory_space<smem>>
    %214 = vector.broadcast %213 : f32 to vector<2x256xf32>
    %215 = arith.mulf %214, %204 : vector<2x256xf32>
    %216 = arith.addf %202, %215 : vector<2x256xf32>
    %c1_i32_29 = arith.constant 1 : i32
    %217 = tpu.dynamic_rotate %29 by %c1_i32_29 dim 1 : vector<2x256xf32>, i32 -> vector<2x256xf32>
    %218 = arith.mulf %217, %11 : vector<2x256xf32>
    %c21 = arith.constant 21 : index
    %219 = memref.load %arg3[%c21] : memref<81xf32, #tpu.memory_space<smem>>
    %220 = vector.broadcast %219 : f32 to vector<2x256xf32>
    %221 = arith.mulf %220, %218 : vector<2x256xf32>
    %222 = arith.addf %208, %221 : vector<2x256xf32>
    %c48 = arith.constant 48 : index
    %223 = memref.load %arg3[%c48] : memref<81xf32, #tpu.memory_space<smem>>
    %224 = vector.broadcast %223 : f32 to vector<2x256xf32>
    %225 = arith.mulf %224, %218 : vector<2x256xf32>
    %226 = arith.addf %212, %225 : vector<2x256xf32>
    %c75 = arith.constant 75 : index
    %227 = memref.load %arg3[%c75] : memref<81xf32, #tpu.memory_space<smem>>
    %228 = vector.broadcast %227 : f32 to vector<2x256xf32>
    %229 = arith.mulf %228, %218 : vector<2x256xf32>
    %230 = arith.addf %216, %229 : vector<2x256xf32>
    %c255_i32 = arith.constant 255 : i32
    %231 = tpu.dynamic_rotate %25 by %c255_i32 dim 1 : vector<2x256xf32>, i32 -> vector<2x256xf32>
    %232 = arith.mulf %231, %14 : vector<2x256xf32>
    %c5_30 = arith.constant 5 : index
    %233 = memref.load %arg3[%c5_30] : memref<81xf32, #tpu.memory_space<smem>>
    %234 = vector.broadcast %233 : f32 to vector<2x256xf32>
    %235 = arith.mulf %234, %232 : vector<2x256xf32>
    %236 = arith.addf %222, %235 : vector<2x256xf32>
    %c32 = arith.constant 32 : index
    %237 = memref.load %arg3[%c32] : memref<81xf32, #tpu.memory_space<smem>>
    %238 = vector.broadcast %237 : f32 to vector<2x256xf32>
    %239 = arith.mulf %238, %232 : vector<2x256xf32>
    %240 = arith.addf %226, %239 : vector<2x256xf32>
    %c59 = arith.constant 59 : index
    %241 = memref.load %arg3[%c59] : memref<81xf32, #tpu.memory_space<smem>>
    %242 = vector.broadcast %241 : f32 to vector<2x256xf32>
    %243 = arith.mulf %242, %232 : vector<2x256xf32>
    %244 = arith.addf %230, %243 : vector<2x256xf32>
    %c255_i32_31 = arith.constant 255 : i32
    %245 = tpu.dynamic_rotate %27 by %c255_i32_31 dim 1 : vector<2x256xf32>, i32 -> vector<2x256xf32>
    %246 = arith.mulf %245, %14 : vector<2x256xf32>
    %c14 = arith.constant 14 : index
    %247 = memref.load %arg3[%c14] : memref<81xf32, #tpu.memory_space<smem>>
    %248 = vector.broadcast %247 : f32 to vector<2x256xf32>
    %249 = arith.mulf %248, %246 : vector<2x256xf32>
    %250 = arith.addf %236, %249 : vector<2x256xf32>
    %c41 = arith.constant 41 : index
    %251 = memref.load %arg3[%c41] : memref<81xf32, #tpu.memory_space<smem>>
    %252 = vector.broadcast %251 : f32 to vector<2x256xf32>
    %253 = arith.mulf %252, %246 : vector<2x256xf32>
    %254 = arith.addf %240, %253 : vector<2x256xf32>
    %c68 = arith.constant 68 : index
    %255 = memref.load %arg3[%c68] : memref<81xf32, #tpu.memory_space<smem>>
    %256 = vector.broadcast %255 : f32 to vector<2x256xf32>
    %257 = arith.mulf %256, %246 : vector<2x256xf32>
    %258 = arith.addf %244, %257 : vector<2x256xf32>
    %c255_i32_32 = arith.constant 255 : i32
    %259 = tpu.dynamic_rotate %29 by %c255_i32_32 dim 1 : vector<2x256xf32>, i32 -> vector<2x256xf32>
    %260 = arith.mulf %259, %14 : vector<2x256xf32>
    %c23 = arith.constant 23 : index
    %261 = memref.load %arg3[%c23] : memref<81xf32, #tpu.memory_space<smem>>
    %262 = vector.broadcast %261 : f32 to vector<2x256xf32>
    %263 = arith.mulf %262, %260 : vector<2x256xf32>
    %264 = arith.addf %250, %263 : vector<2x256xf32>
    %c50 = arith.constant 50 : index
    %265 = memref.load %arg3[%c50] : memref<81xf32, #tpu.memory_space<smem>>
    %266 = vector.broadcast %265 : f32 to vector<2x256xf32>
    %267 = arith.mulf %266, %260 : vector<2x256xf32>
    %268 = arith.addf %254, %267 : vector<2x256xf32>
    %c77 = arith.constant 77 : index
    %269 = memref.load %arg3[%c77] : memref<81xf32, #tpu.memory_space<smem>>
    %270 = vector.broadcast %269 : f32 to vector<2x256xf32>
    %271 = arith.mulf %270, %260 : vector<2x256xf32>
    %272 = arith.addf %258, %271 : vector<2x256xf32>
    %c241_i32 = arith.constant 241 : i32
    %273 = tpu.dynamic_rotate %25 by %c241_i32 dim 1 : vector<2x256xf32>, i32 -> vector<2x256xf32>
    %274 = arith.mulf %273, %17 : vector<2x256xf32>
    %c6_33 = arith.constant 6 : index
    %275 = memref.load %arg3[%c6_33] : memref<81xf32, #tpu.memory_space<smem>>
    %276 = vector.broadcast %275 : f32 to vector<2x256xf32>
    %277 = arith.mulf %276, %274 : vector<2x256xf32>
    %278 = arith.addf %264, %277 : vector<2x256xf32>
    %c33 = arith.constant 33 : index
    %279 = memref.load %arg3[%c33] : memref<81xf32, #tpu.memory_space<smem>>
    %280 = vector.broadcast %279 : f32 to vector<2x256xf32>
    %281 = arith.mulf %280, %274 : vector<2x256xf32>
    %282 = arith.addf %268, %281 : vector<2x256xf32>
    %c60 = arith.constant 60 : index
    %283 = memref.load %arg3[%c60] : memref<81xf32, #tpu.memory_space<smem>>
    %284 = vector.broadcast %283 : f32 to vector<2x256xf32>
    %285 = arith.mulf %284, %274 : vector<2x256xf32>
    %286 = arith.addf %272, %285 : vector<2x256xf32>
    %c241_i32_34 = arith.constant 241 : i32
    %287 = tpu.dynamic_rotate %27 by %c241_i32_34 dim 1 : vector<2x256xf32>, i32 -> vector<2x256xf32>
    %288 = arith.mulf %287, %17 : vector<2x256xf32>
    %c15 = arith.constant 15 : index
    %289 = memref.load %arg3[%c15] : memref<81xf32, #tpu.memory_space<smem>>
    %290 = vector.broadcast %289 : f32 to vector<2x256xf32>
    %291 = arith.mulf %290, %288 : vector<2x256xf32>
    %292 = arith.addf %278, %291 : vector<2x256xf32>
    %c42 = arith.constant 42 : index
    %293 = memref.load %arg3[%c42] : memref<81xf32, #tpu.memory_space<smem>>
    %294 = vector.broadcast %293 : f32 to vector<2x256xf32>
    %295 = arith.mulf %294, %288 : vector<2x256xf32>
    %296 = arith.addf %282, %295 : vector<2x256xf32>
    %c69 = arith.constant 69 : index
    %297 = memref.load %arg3[%c69] : memref<81xf32, #tpu.memory_space<smem>>
    %298 = vector.broadcast %297 : f32 to vector<2x256xf32>
    %299 = arith.mulf %298, %288 : vector<2x256xf32>
    %300 = arith.addf %286, %299 : vector<2x256xf32>
    %c241_i32_35 = arith.constant 241 : i32
    %301 = tpu.dynamic_rotate %29 by %c241_i32_35 dim 1 : vector<2x256xf32>, i32 -> vector<2x256xf32>
    %302 = arith.mulf %301, %17 : vector<2x256xf32>
    %c24 = arith.constant 24 : index
    %303 = memref.load %arg3[%c24] : memref<81xf32, #tpu.memory_space<smem>>
    %304 = vector.broadcast %303 : f32 to vector<2x256xf32>
    %305 = arith.mulf %304, %302 : vector<2x256xf32>
    %306 = arith.addf %292, %305 : vector<2x256xf32>
    %c51 = arith.constant 51 : index
    %307 = memref.load %arg3[%c51] : memref<81xf32, #tpu.memory_space<smem>>
    %308 = vector.broadcast %307 : f32 to vector<2x256xf32>
    %309 = arith.mulf %308, %302 : vector<2x256xf32>
    %310 = arith.addf %296, %309 : vector<2x256xf32>
    %c78 = arith.constant 78 : index
    %311 = memref.load %arg3[%c78] : memref<81xf32, #tpu.memory_space<smem>>
    %312 = vector.broadcast %311 : f32 to vector<2x256xf32>
    %313 = arith.mulf %312, %302 : vector<2x256xf32>
    %314 = arith.addf %300, %313 : vector<2x256xf32>
    %c240_i32 = arith.constant 240 : i32
    %315 = tpu.dynamic_rotate %25 by %c240_i32 dim 1 : vector<2x256xf32>, i32 -> vector<2x256xf32>
    %316 = arith.mulf %315, %20 : vector<2x256xf32>
    %c7_36 = arith.constant 7 : index
    %317 = memref.load %arg3[%c7_36] : memref<81xf32, #tpu.memory_space<smem>>
    %318 = vector.broadcast %317 : f32 to vector<2x256xf32>
    %319 = arith.mulf %318, %316 : vector<2x256xf32>
    %320 = arith.addf %306, %319 : vector<2x256xf32>
    %c34 = arith.constant 34 : index
    %321 = memref.load %arg3[%c34] : memref<81xf32, #tpu.memory_space<smem>>
    %322 = vector.broadcast %321 : f32 to vector<2x256xf32>
    %323 = arith.mulf %322, %316 : vector<2x256xf32>
    %324 = arith.addf %310, %323 : vector<2x256xf32>
    %c61 = arith.constant 61 : index
    %325 = memref.load %arg3[%c61] : memref<81xf32, #tpu.memory_space<smem>>
    %326 = vector.broadcast %325 : f32 to vector<2x256xf32>
    %327 = arith.mulf %326, %316 : vector<2x256xf32>
    %328 = arith.addf %314, %327 : vector<2x256xf32>
    %c240_i32_37 = arith.constant 240 : i32
    %329 = tpu.dynamic_rotate %27 by %c240_i32_37 dim 1 : vector<2x256xf32>, i32 -> vector<2x256xf32>
    %330 = arith.mulf %329, %20 : vector<2x256xf32>
    %c16 = arith.constant 16 : index
    %331 = memref.load %arg3[%c16] : memref<81xf32, #tpu.memory_space<smem>>
    %332 = vector.broadcast %331 : f32 to vector<2x256xf32>
    %333 = arith.mulf %332, %330 : vector<2x256xf32>
    %334 = arith.addf %320, %333 : vector<2x256xf32>
    %c43 = arith.constant 43 : index
    %335 = memref.load %arg3[%c43] : memref<81xf32, #tpu.memory_space<smem>>
    %336 = vector.broadcast %335 : f32 to vector<2x256xf32>
    %337 = arith.mulf %336, %330 : vector<2x256xf32>
    %338 = arith.addf %324, %337 : vector<2x256xf32>
    %c70 = arith.constant 70 : index
    %339 = memref.load %arg3[%c70] : memref<81xf32, #tpu.memory_space<smem>>
    %340 = vector.broadcast %339 : f32 to vector<2x256xf32>
    %341 = arith.mulf %340, %330 : vector<2x256xf32>
    %342 = arith.addf %328, %341 : vector<2x256xf32>
    %c240_i32_38 = arith.constant 240 : i32
    %343 = tpu.dynamic_rotate %29 by %c240_i32_38 dim 1 : vector<2x256xf32>, i32 -> vector<2x256xf32>
    %344 = arith.mulf %343, %20 : vector<2x256xf32>
    %c25 = arith.constant 25 : index
    %345 = memref.load %arg3[%c25] : memref<81xf32, #tpu.memory_space<smem>>
    %346 = vector.broadcast %345 : f32 to vector<2x256xf32>
    %347 = arith.mulf %346, %344 : vector<2x256xf32>
    %348 = arith.addf %334, %347 : vector<2x256xf32>
    %c52 = arith.constant 52 : index
    %349 = memref.load %arg3[%c52] : memref<81xf32, #tpu.memory_space<smem>>
    %350 = vector.broadcast %349 : f32 to vector<2x256xf32>
    %351 = arith.mulf %350, %344 : vector<2x256xf32>
    %352 = arith.addf %338, %351 : vector<2x256xf32>
    %c79 = arith.constant 79 : index
    %353 = memref.load %arg3[%c79] : memref<81xf32, #tpu.memory_space<smem>>
    %354 = vector.broadcast %353 : f32 to vector<2x256xf32>
    %355 = arith.mulf %354, %344 : vector<2x256xf32>
    %356 = arith.addf %342, %355 : vector<2x256xf32>
    %c239_i32 = arith.constant 239 : i32
    %357 = tpu.dynamic_rotate %25 by %c239_i32 dim 1 : vector<2x256xf32>, i32 -> vector<2x256xf32>
    %358 = arith.mulf %357, %23 : vector<2x256xf32>
    %c8 = arith.constant 8 : index
    %359 = memref.load %arg3[%c8] : memref<81xf32, #tpu.memory_space<smem>>
    %360 = vector.broadcast %359 : f32 to vector<2x256xf32>
    %361 = arith.mulf %360, %358 : vector<2x256xf32>
    %362 = arith.addf %348, %361 : vector<2x256xf32>
    %c35 = arith.constant 35 : index
    %363 = memref.load %arg3[%c35] : memref<81xf32, #tpu.memory_space<smem>>
    %364 = vector.broadcast %363 : f32 to vector<2x256xf32>
    %365 = arith.mulf %364, %358 : vector<2x256xf32>
    %366 = arith.addf %352, %365 : vector<2x256xf32>
    %c62 = arith.constant 62 : index
    %367 = memref.load %arg3[%c62] : memref<81xf32, #tpu.memory_space<smem>>
    %368 = vector.broadcast %367 : f32 to vector<2x256xf32>
    %369 = arith.mulf %368, %358 : vector<2x256xf32>
    %370 = arith.addf %356, %369 : vector<2x256xf32>
    %c239_i32_39 = arith.constant 239 : i32
    %371 = tpu.dynamic_rotate %27 by %c239_i32_39 dim 1 : vector<2x256xf32>, i32 -> vector<2x256xf32>
    %372 = arith.mulf %371, %23 : vector<2x256xf32>
    %c17 = arith.constant 17 : index
    %373 = memref.load %arg3[%c17] : memref<81xf32, #tpu.memory_space<smem>>
    %374 = vector.broadcast %373 : f32 to vector<2x256xf32>
    %375 = arith.mulf %374, %372 : vector<2x256xf32>
    %376 = arith.addf %362, %375 : vector<2x256xf32>
    %c44 = arith.constant 44 : index
    %377 = memref.load %arg3[%c44] : memref<81xf32, #tpu.memory_space<smem>>
    %378 = vector.broadcast %377 : f32 to vector<2x256xf32>
    %379 = arith.mulf %378, %372 : vector<2x256xf32>
    %380 = arith.addf %366, %379 : vector<2x256xf32>
    %c71 = arith.constant 71 : index
    %381 = memref.load %arg3[%c71] : memref<81xf32, #tpu.memory_space<smem>>
    %382 = vector.broadcast %381 : f32 to vector<2x256xf32>
    %383 = arith.mulf %382, %372 : vector<2x256xf32>
    %384 = arith.addf %370, %383 : vector<2x256xf32>
    %c239_i32_40 = arith.constant 239 : i32
    %385 = tpu.dynamic_rotate %29 by %c239_i32_40 dim 1 : vector<2x256xf32>, i32 -> vector<2x256xf32>
    %386 = arith.mulf %385, %23 : vector<2x256xf32>
    %c26 = arith.constant 26 : index
    %387 = memref.load %arg3[%c26] : memref<81xf32, #tpu.memory_space<smem>>
    %388 = vector.broadcast %387 : f32 to vector<2x256xf32>
    %389 = arith.mulf %388, %386 : vector<2x256xf32>
    %390 = arith.addf %376, %389 : vector<2x256xf32>
    %c53 = arith.constant 53 : index
    %391 = memref.load %arg3[%c53] : memref<81xf32, #tpu.memory_space<smem>>
    %392 = vector.broadcast %391 : f32 to vector<2x256xf32>
    %393 = arith.mulf %392, %386 : vector<2x256xf32>
    %394 = arith.addf %380, %393 : vector<2x256xf32>
    %c80 = arith.constant 80 : index
    %395 = memref.load %arg3[%c80] : memref<81xf32, #tpu.memory_space<smem>>
    %396 = vector.broadcast %395 : f32 to vector<2x256xf32>
    %397 = arith.mulf %396, %386 : vector<2x256xf32>
    %398 = arith.addf %384, %397 : vector<2x256xf32>
    %c0_41 = arith.constant 0 : index
    %399 = memref.load %arg4[%c0_41] : memref<3xf32, #tpu.memory_space<smem>>
    %400 = vector.broadcast %399 : f32 to vector<2x256xf32>
    %401 = arith.addf %390, %400 : vector<2x256xf32>
    %cst = arith.constant 0.000000e+00 : f32
    %402 = vector.broadcast %cst : f32 to vector<2x256xf32>
    %403 = arith.maximumf %401, %402 : vector<2x256xf32>
    %c1_42 = arith.constant 1 : index
    %404 = memref.load %arg4[%c1_42] : memref<3xf32, #tpu.memory_space<smem>>
    %405 = vector.broadcast %404 : f32 to vector<2x256xf32>
    %406 = arith.addf %394, %405 : vector<2x256xf32>
    %cst_43 = arith.constant 0.000000e+00 : f32
    %407 = vector.broadcast %cst_43 : f32 to vector<2x256xf32>
    %408 = arith.maximumf %406, %407 : vector<2x256xf32>
    %c2_44 = arith.constant 2 : index
    %409 = memref.load %arg4[%c2_44] : memref<3xf32, #tpu.memory_space<smem>>
    %410 = vector.broadcast %409 : f32 to vector<2x256xf32>
    %411 = arith.addf %398, %410 : vector<2x256xf32>
    %cst_45 = arith.constant 0.000000e+00 : f32
    %412 = vector.broadcast %cst_45 : f32 to vector<2x256xf32>
    %413 = arith.maximumf %411, %412 : vector<2x256xf32>
    %c4_46 = arith.constant 4 : index
    %414 = memref.load %arg5[%c4_46] : memref<81xf32, #tpu.memory_space<smem>>
    %415 = vector.broadcast %414 : f32 to vector<2x256xf32>
    %416 = arith.mulf %415, %403 : vector<2x256xf32>
    %c31_47 = arith.constant 31 : index
    %417 = memref.load %arg5[%c31_47] : memref<81xf32, #tpu.memory_space<smem>>
    %418 = vector.broadcast %417 : f32 to vector<2x256xf32>
    %419 = arith.mulf %418, %403 : vector<2x256xf32>
    %c58_48 = arith.constant 58 : index
    %420 = memref.load %arg5[%c58_48] : memref<81xf32, #tpu.memory_space<smem>>
    %421 = vector.broadcast %420 : f32 to vector<2x256xf32>
    %422 = arith.mulf %421, %403 : vector<2x256xf32>
    %c13_49 = arith.constant 13 : index
    %423 = memref.load %arg5[%c13_49] : memref<81xf32, #tpu.memory_space<smem>>
    %424 = vector.broadcast %423 : f32 to vector<2x256xf32>
    %425 = arith.mulf %424, %408 : vector<2x256xf32>
    %426 = arith.addf %416, %425 : vector<2x256xf32>
    %c40_50 = arith.constant 40 : index
    %427 = memref.load %arg5[%c40_50] : memref<81xf32, #tpu.memory_space<smem>>
    %428 = vector.broadcast %427 : f32 to vector<2x256xf32>
    %429 = arith.mulf %428, %408 : vector<2x256xf32>
    %430 = arith.addf %419, %429 : vector<2x256xf32>
    %c67_51 = arith.constant 67 : index
    %431 = memref.load %arg5[%c67_51] : memref<81xf32, #tpu.memory_space<smem>>
    %432 = vector.broadcast %431 : f32 to vector<2x256xf32>
    %433 = arith.mulf %432, %408 : vector<2x256xf32>
    %434 = arith.addf %422, %433 : vector<2x256xf32>
    %c22_52 = arith.constant 22 : index
    %435 = memref.load %arg5[%c22_52] : memref<81xf32, #tpu.memory_space<smem>>
    %436 = vector.broadcast %435 : f32 to vector<2x256xf32>
    %437 = arith.mulf %436, %413 : vector<2x256xf32>
    %438 = arith.addf %426, %437 : vector<2x256xf32>
    %c49_53 = arith.constant 49 : index
    %439 = memref.load %arg5[%c49_53] : memref<81xf32, #tpu.memory_space<smem>>
    %440 = vector.broadcast %439 : f32 to vector<2x256xf32>
    %441 = arith.mulf %440, %413 : vector<2x256xf32>
    %442 = arith.addf %430, %441 : vector<2x256xf32>
    %c76_54 = arith.constant 76 : index
    %443 = memref.load %arg5[%c76_54] : memref<81xf32, #tpu.memory_space<smem>>
    %444 = vector.broadcast %443 : f32 to vector<2x256xf32>
    %445 = arith.mulf %444, %413 : vector<2x256xf32>
    %446 = arith.addf %434, %445 : vector<2x256xf32>
    %c17_i32_55 = arith.constant 17 : i32
    %447 = tpu.dynamic_rotate %403 by %c17_i32_55 dim 1 : vector<2x256xf32>, i32 -> vector<2x256xf32>
    %448 = arith.mulf %447, %2 : vector<2x256xf32>
    %c0_56 = arith.constant 0 : index
    %449 = memref.load %arg5[%c0_56] : memref<81xf32, #tpu.memory_space<smem>>
    %450 = vector.broadcast %449 : f32 to vector<2x256xf32>
    %451 = arith.mulf %450, %448 : vector<2x256xf32>
    %452 = arith.addf %438, %451 : vector<2x256xf32>
    %c27_57 = arith.constant 27 : index
    %453 = memref.load %arg5[%c27_57] : memref<81xf32, #tpu.memory_space<smem>>
    %454 = vector.broadcast %453 : f32 to vector<2x256xf32>
    %455 = arith.mulf %454, %448 : vector<2x256xf32>
    %456 = arith.addf %442, %455 : vector<2x256xf32>
    %c54_58 = arith.constant 54 : index
    %457 = memref.load %arg5[%c54_58] : memref<81xf32, #tpu.memory_space<smem>>
    %458 = vector.broadcast %457 : f32 to vector<2x256xf32>
    %459 = arith.mulf %458, %448 : vector<2x256xf32>
    %460 = arith.addf %446, %459 : vector<2x256xf32>
    %c17_i32_59 = arith.constant 17 : i32
    %461 = tpu.dynamic_rotate %408 by %c17_i32_59 dim 1 : vector<2x256xf32>, i32 -> vector<2x256xf32>
    %462 = arith.mulf %461, %2 : vector<2x256xf32>
    %c9_60 = arith.constant 9 : index
    %463 = memref.load %arg5[%c9_60] : memref<81xf32, #tpu.memory_space<smem>>
    %464 = vector.broadcast %463 : f32 to vector<2x256xf32>
    %465 = arith.mulf %464, %462 : vector<2x256xf32>
    %466 = arith.addf %452, %465 : vector<2x256xf32>
    %c36_61 = arith.constant 36 : index
    %467 = memref.load %arg5[%c36_61] : memref<81xf32, #tpu.memory_space<smem>>
    %468 = vector.broadcast %467 : f32 to vector<2x256xf32>
    %469 = arith.mulf %468, %462 : vector<2x256xf32>
    %470 = arith.addf %456, %469 : vector<2x256xf32>
    %c63_62 = arith.constant 63 : index
    %471 = memref.load %arg5[%c63_62] : memref<81xf32, #tpu.memory_space<smem>>
    %472 = vector.broadcast %471 : f32 to vector<2x256xf32>
    %473 = arith.mulf %472, %462 : vector<2x256xf32>
    %474 = arith.addf %460, %473 : vector<2x256xf32>
    %c17_i32_63 = arith.constant 17 : i32
    %475 = tpu.dynamic_rotate %413 by %c17_i32_63 dim 1 : vector<2x256xf32>, i32 -> vector<2x256xf32>
    %476 = arith.mulf %475, %2 : vector<2x256xf32>
    %c18_64 = arith.constant 18 : index
    %477 = memref.load %arg5[%c18_64] : memref<81xf32, #tpu.memory_space<smem>>
    %478 = vector.broadcast %477 : f32 to vector<2x256xf32>
    %479 = arith.mulf %478, %476 : vector<2x256xf32>
    %480 = arith.addf %466, %479 : vector<2x256xf32>
    %c45_65 = arith.constant 45 : index
    %481 = memref.load %arg5[%c45_65] : memref<81xf32, #tpu.memory_space<smem>>
    %482 = vector.broadcast %481 : f32 to vector<2x256xf32>
    %483 = arith.mulf %482, %476 : vector<2x256xf32>
    %484 = arith.addf %470, %483 : vector<2x256xf32>
    %c72_66 = arith.constant 72 : index
    %485 = memref.load %arg5[%c72_66] : memref<81xf32, #tpu.memory_space<smem>>
    %486 = vector.broadcast %485 : f32 to vector<2x256xf32>
    %487 = arith.mulf %486, %476 : vector<2x256xf32>
    %488 = arith.addf %474, %487 : vector<2x256xf32>
    %c16_i32_67 = arith.constant 16 : i32
    %489 = tpu.dynamic_rotate %403 by %c16_i32_67 dim 1 : vector<2x256xf32>, i32 -> vector<2x256xf32>
    %490 = arith.mulf %489, %5 : vector<2x256xf32>
    %c1_68 = arith.constant 1 : index
    %491 = memref.load %arg5[%c1_68] : memref<81xf32, #tpu.memory_space<smem>>
    %492 = vector.broadcast %491 : f32 to vector<2x256xf32>
    %493 = arith.mulf %492, %490 : vector<2x256xf32>
    %494 = arith.addf %480, %493 : vector<2x256xf32>
    %c28_69 = arith.constant 28 : index
    %495 = memref.load %arg5[%c28_69] : memref<81xf32, #tpu.memory_space<smem>>
    %496 = vector.broadcast %495 : f32 to vector<2x256xf32>
    %497 = arith.mulf %496, %490 : vector<2x256xf32>
    %498 = arith.addf %484, %497 : vector<2x256xf32>
    %c55_70 = arith.constant 55 : index
    %499 = memref.load %arg5[%c55_70] : memref<81xf32, #tpu.memory_space<smem>>
    %500 = vector.broadcast %499 : f32 to vector<2x256xf32>
    %501 = arith.mulf %500, %490 : vector<2x256xf32>
    %502 = arith.addf %488, %501 : vector<2x256xf32>
    %c16_i32_71 = arith.constant 16 : i32
    %503 = tpu.dynamic_rotate %408 by %c16_i32_71 dim 1 : vector<2x256xf32>, i32 -> vector<2x256xf32>
    %504 = arith.mulf %503, %5 : vector<2x256xf32>
    %c10_72 = arith.constant 10 : index
    %505 = memref.load %arg5[%c10_72] : memref<81xf32, #tpu.memory_space<smem>>
    %506 = vector.broadcast %505 : f32 to vector<2x256xf32>
    %507 = arith.mulf %506, %504 : vector<2x256xf32>
    %508 = arith.addf %494, %507 : vector<2x256xf32>
    %c37_73 = arith.constant 37 : index
    %509 = memref.load %arg5[%c37_73] : memref<81xf32, #tpu.memory_space<smem>>
    %510 = vector.broadcast %509 : f32 to vector<2x256xf32>
    %511 = arith.mulf %510, %504 : vector<2x256xf32>
    %512 = arith.addf %498, %511 : vector<2x256xf32>
    %c64_74 = arith.constant 64 : index
    %513 = memref.load %arg5[%c64_74] : memref<81xf32, #tpu.memory_space<smem>>
    %514 = vector.broadcast %513 : f32 to vector<2x256xf32>
    %515 = arith.mulf %514, %504 : vector<2x256xf32>
    %516 = arith.addf %502, %515 : vector<2x256xf32>
    %c16_i32_75 = arith.constant 16 : i32
    %517 = tpu.dynamic_rotate %413 by %c16_i32_75 dim 1 : vector<2x256xf32>, i32 -> vector<2x256xf32>
    %518 = arith.mulf %517, %5 : vector<2x256xf32>
    %c19_76 = arith.constant 19 : index
    %519 = memref.load %arg5[%c19_76] : memref<81xf32, #tpu.memory_space<smem>>
    %520 = vector.broadcast %519 : f32 to vector<2x256xf32>
    %521 = arith.mulf %520, %518 : vector<2x256xf32>
    %522 = arith.addf %508, %521 : vector<2x256xf32>
    %c46_77 = arith.constant 46 : index
    %523 = memref.load %arg5[%c46_77] : memref<81xf32, #tpu.memory_space<smem>>
    %524 = vector.broadcast %523 : f32 to vector<2x256xf32>
    %525 = arith.mulf %524, %518 : vector<2x256xf32>
    %526 = arith.addf %512, %525 : vector<2x256xf32>
    %c73_78 = arith.constant 73 : index
    %527 = memref.load %arg5[%c73_78] : memref<81xf32, #tpu.memory_space<smem>>
    %528 = vector.broadcast %527 : f32 to vector<2x256xf32>
    %529 = arith.mulf %528, %518 : vector<2x256xf32>
    %530 = arith.addf %516, %529 : vector<2x256xf32>
    %c15_i32_79 = arith.constant 15 : i32
    %531 = tpu.dynamic_rotate %403 by %c15_i32_79 dim 1 : vector<2x256xf32>, i32 -> vector<2x256xf32>
    %532 = arith.mulf %531, %8 : vector<2x256xf32>
    %c2_80 = arith.constant 2 : index
    %533 = memref.load %arg5[%c2_80] : memref<81xf32, #tpu.memory_space<smem>>
    %534 = vector.broadcast %533 : f32 to vector<2x256xf32>
    %535 = arith.mulf %534, %532 : vector<2x256xf32>
    %536 = arith.addf %522, %535 : vector<2x256xf32>
    %c29_81 = arith.constant 29 : index
    %537 = memref.load %arg5[%c29_81] : memref<81xf32, #tpu.memory_space<smem>>
    %538 = vector.broadcast %537 : f32 to vector<2x256xf32>
    %539 = arith.mulf %538, %532 : vector<2x256xf32>
    %540 = arith.addf %526, %539 : vector<2x256xf32>
    %c56_82 = arith.constant 56 : index
    %541 = memref.load %arg5[%c56_82] : memref<81xf32, #tpu.memory_space<smem>>
    %542 = vector.broadcast %541 : f32 to vector<2x256xf32>
    %543 = arith.mulf %542, %532 : vector<2x256xf32>
    %544 = arith.addf %530, %543 : vector<2x256xf32>
    %c15_i32_83 = arith.constant 15 : i32
    %545 = tpu.dynamic_rotate %408 by %c15_i32_83 dim 1 : vector<2x256xf32>, i32 -> vector<2x256xf32>
    %546 = arith.mulf %545, %8 : vector<2x256xf32>
    %c11_84 = arith.constant 11 : index
    %547 = memref.load %arg5[%c11_84] : memref<81xf32, #tpu.memory_space<smem>>
    %548 = vector.broadcast %547 : f32 to vector<2x256xf32>
    %549 = arith.mulf %548, %546 : vector<2x256xf32>
    %550 = arith.addf %536, %549 : vector<2x256xf32>
    %c38_85 = arith.constant 38 : index
    %551 = memref.load %arg5[%c38_85] : memref<81xf32, #tpu.memory_space<smem>>
    %552 = vector.broadcast %551 : f32 to vector<2x256xf32>
    %553 = arith.mulf %552, %546 : vector<2x256xf32>
    %554 = arith.addf %540, %553 : vector<2x256xf32>
    %c65_86 = arith.constant 65 : index
    %555 = memref.load %arg5[%c65_86] : memref<81xf32, #tpu.memory_space<smem>>
    %556 = vector.broadcast %555 : f32 to vector<2x256xf32>
    %557 = arith.mulf %556, %546 : vector<2x256xf32>
    %558 = arith.addf %544, %557 : vector<2x256xf32>
    %c15_i32_87 = arith.constant 15 : i32
    %559 = tpu.dynamic_rotate %413 by %c15_i32_87 dim 1 : vector<2x256xf32>, i32 -> vector<2x256xf32>
    %560 = arith.mulf %559, %8 : vector<2x256xf32>
    %c20_88 = arith.constant 20 : index
    %561 = memref.load %arg5[%c20_88] : memref<81xf32, #tpu.memory_space<smem>>
    %562 = vector.broadcast %561 : f32 to vector<2x256xf32>
    %563 = arith.mulf %562, %560 : vector<2x256xf32>
    %564 = arith.addf %550, %563 : vector<2x256xf32>
    %c47_89 = arith.constant 47 : index
    %565 = memref.load %arg5[%c47_89] : memref<81xf32, #tpu.memory_space<smem>>
    %566 = vector.broadcast %565 : f32 to vector<2x256xf32>
    %567 = arith.mulf %566, %560 : vector<2x256xf32>
    %568 = arith.addf %554, %567 : vector<2x256xf32>
    %c74_90 = arith.constant 74 : index
    %569 = memref.load %arg5[%c74_90] : memref<81xf32, #tpu.memory_space<smem>>
    %570 = vector.broadcast %569 : f32 to vector<2x256xf32>
    %571 = arith.mulf %570, %560 : vector<2x256xf32>
    %572 = arith.addf %558, %571 : vector<2x256xf32>
    %c1_i32_91 = arith.constant 1 : i32
    %573 = tpu.dynamic_rotate %403 by %c1_i32_91 dim 1 : vector<2x256xf32>, i32 -> vector<2x256xf32>
    %574 = arith.mulf %573, %11 : vector<2x256xf32>
    %c3_92 = arith.constant 3 : index
    %575 = memref.load %arg5[%c3_92] : memref<81xf32, #tpu.memory_space<smem>>
    %576 = vector.broadcast %575 : f32 to vector<2x256xf32>
    %577 = arith.mulf %576, %574 : vector<2x256xf32>
    %578 = arith.addf %564, %577 : vector<2x256xf32>
    %c30_93 = arith.constant 30 : index
    %579 = memref.load %arg5[%c30_93] : memref<81xf32, #tpu.memory_space<smem>>
    %580 = vector.broadcast %579 : f32 to vector<2x256xf32>
    %581 = arith.mulf %580, %574 : vector<2x256xf32>
    %582 = arith.addf %568, %581 : vector<2x256xf32>
    %c57_94 = arith.constant 57 : index
    %583 = memref.load %arg5[%c57_94] : memref<81xf32, #tpu.memory_space<smem>>
    %584 = vector.broadcast %583 : f32 to vector<2x256xf32>
    %585 = arith.mulf %584, %574 : vector<2x256xf32>
    %586 = arith.addf %572, %585 : vector<2x256xf32>
    %c1_i32_95 = arith.constant 1 : i32
    %587 = tpu.dynamic_rotate %408 by %c1_i32_95 dim 1 : vector<2x256xf32>, i32 -> vector<2x256xf32>
    %588 = arith.mulf %587, %11 : vector<2x256xf32>
    %c12_96 = arith.constant 12 : index
    %589 = memref.load %arg5[%c12_96] : memref<81xf32, #tpu.memory_space<smem>>
    %590 = vector.broadcast %589 : f32 to vector<2x256xf32>
    %591 = arith.mulf %590, %588 : vector<2x256xf32>
    %592 = arith.addf %578, %591 : vector<2x256xf32>
    %c39_97 = arith.constant 39 : index
    %593 = memref.load %arg5[%c39_97] : memref<81xf32, #tpu.memory_space<smem>>
    %594 = vector.broadcast %593 : f32 to vector<2x256xf32>
    %595 = arith.mulf %594, %588 : vector<2x256xf32>
    %596 = arith.addf %582, %595 : vector<2x256xf32>
    %c66_98 = arith.constant 66 : index
    %597 = memref.load %arg5[%c66_98] : memref<81xf32, #tpu.memory_space<smem>>
    %598 = vector.broadcast %597 : f32 to vector<2x256xf32>
    %599 = arith.mulf %598, %588 : vector<2x256xf32>
    %600 = arith.addf %586, %599 : vector<2x256xf32>
    %c1_i32_99 = arith.constant 1 : i32
    %601 = tpu.dynamic_rotate %413 by %c1_i32_99 dim 1 : vector<2x256xf32>, i32 -> vector<2x256xf32>
    %602 = arith.mulf %601, %11 : vector<2x256xf32>
    %c21_100 = arith.constant 21 : index
    %603 = memref.load %arg5[%c21_100] : memref<81xf32, #tpu.memory_space<smem>>
    %604 = vector.broadcast %603 : f32 to vector<2x256xf32>
    %605 = arith.mulf %604, %602 : vector<2x256xf32>
    %606 = arith.addf %592, %605 : vector<2x256xf32>
    %c48_101 = arith.constant 48 : index
    %607 = memref.load %arg5[%c48_101] : memref<81xf32, #tpu.memory_space<smem>>
    %608 = vector.broadcast %607 : f32 to vector<2x256xf32>
    %609 = arith.mulf %608, %602 : vector<2x256xf32>
    %610 = arith.addf %596, %609 : vector<2x256xf32>
    %c75_102 = arith.constant 75 : index
    %611 = memref.load %arg5[%c75_102] : memref<81xf32, #tpu.memory_space<smem>>
    %612 = vector.broadcast %611 : f32 to vector<2x256xf32>
    %613 = arith.mulf %612, %602 : vector<2x256xf32>
    %614 = arith.addf %600, %613 : vector<2x256xf32>
    %c255_i32_103 = arith.constant 255 : i32
    %615 = tpu.dynamic_rotate %403 by %c255_i32_103 dim 1 : vector<2x256xf32>, i32 -> vector<2x256xf32>
    %616 = arith.mulf %615, %14 : vector<2x256xf32>
    %c5_104 = arith.constant 5 : index
    %617 = memref.load %arg5[%c5_104] : memref<81xf32, #tpu.memory_space<smem>>
    %618 = vector.broadcast %617 : f32 to vector<2x256xf32>
    %619 = arith.mulf %618, %616 : vector<2x256xf32>
    %620 = arith.addf %606, %619 : vector<2x256xf32>
    %c32_105 = arith.constant 32 : index
    %621 = memref.load %arg5[%c32_105] : memref<81xf32, #tpu.memory_space<smem>>
    %622 = vector.broadcast %621 : f32 to vector<2x256xf32>
    %623 = arith.mulf %622, %616 : vector<2x256xf32>
    %624 = arith.addf %610, %623 : vector<2x256xf32>
    %c59_106 = arith.constant 59 : index
    %625 = memref.load %arg5[%c59_106] : memref<81xf32, #tpu.memory_space<smem>>
    %626 = vector.broadcast %625 : f32 to vector<2x256xf32>
    %627 = arith.mulf %626, %616 : vector<2x256xf32>
    %628 = arith.addf %614, %627 : vector<2x256xf32>
    %c255_i32_107 = arith.constant 255 : i32
    %629 = tpu.dynamic_rotate %408 by %c255_i32_107 dim 1 : vector<2x256xf32>, i32 -> vector<2x256xf32>
    %630 = arith.mulf %629, %14 : vector<2x256xf32>
    %c14_108 = arith.constant 14 : index
    %631 = memref.load %arg5[%c14_108] : memref<81xf32, #tpu.memory_space<smem>>
    %632 = vector.broadcast %631 : f32 to vector<2x256xf32>
    %633 = arith.mulf %632, %630 : vector<2x256xf32>
    %634 = arith.addf %620, %633 : vector<2x256xf32>
    %c41_109 = arith.constant 41 : index
    %635 = memref.load %arg5[%c41_109] : memref<81xf32, #tpu.memory_space<smem>>
    %636 = vector.broadcast %635 : f32 to vector<2x256xf32>
    %637 = arith.mulf %636, %630 : vector<2x256xf32>
    %638 = arith.addf %624, %637 : vector<2x256xf32>
    %c68_110 = arith.constant 68 : index
    %639 = memref.load %arg5[%c68_110] : memref<81xf32, #tpu.memory_space<smem>>
    %640 = vector.broadcast %639 : f32 to vector<2x256xf32>
    %641 = arith.mulf %640, %630 : vector<2x256xf32>
    %642 = arith.addf %628, %641 : vector<2x256xf32>
    %c255_i32_111 = arith.constant 255 : i32
    %643 = tpu.dynamic_rotate %413 by %c255_i32_111 dim 1 : vector<2x256xf32>, i32 -> vector<2x256xf32>
    %644 = arith.mulf %643, %14 : vector<2x256xf32>
    %c23_112 = arith.constant 23 : index
    %645 = memref.load %arg5[%c23_112] : memref<81xf32, #tpu.memory_space<smem>>
    %646 = vector.broadcast %645 : f32 to vector<2x256xf32>
    %647 = arith.mulf %646, %644 : vector<2x256xf32>
    %648 = arith.addf %634, %647 : vector<2x256xf32>
    %c50_113 = arith.constant 50 : index
    %649 = memref.load %arg5[%c50_113] : memref<81xf32, #tpu.memory_space<smem>>
    %650 = vector.broadcast %649 : f32 to vector<2x256xf32>
    %651 = arith.mulf %650, %644 : vector<2x256xf32>
    %652 = arith.addf %638, %651 : vector<2x256xf32>
    %c77_114 = arith.constant 77 : index
    %653 = memref.load %arg5[%c77_114] : memref<81xf32, #tpu.memory_space<smem>>
    %654 = vector.broadcast %653 : f32 to vector<2x256xf32>
    %655 = arith.mulf %654, %644 : vector<2x256xf32>
    %656 = arith.addf %642, %655 : vector<2x256xf32>
    %c241_i32_115 = arith.constant 241 : i32
    %657 = tpu.dynamic_rotate %403 by %c241_i32_115 dim 1 : vector<2x256xf32>, i32 -> vector<2x256xf32>
    %658 = arith.mulf %657, %17 : vector<2x256xf32>
    %c6_116 = arith.constant 6 : index
    %659 = memref.load %arg5[%c6_116] : memref<81xf32, #tpu.memory_space<smem>>
    %660 = vector.broadcast %659 : f32 to vector<2x256xf32>
    %661 = arith.mulf %660, %658 : vector<2x256xf32>
    %662 = arith.addf %648, %661 : vector<2x256xf32>
    %c33_117 = arith.constant 33 : index
    %663 = memref.load %arg5[%c33_117] : memref<81xf32, #tpu.memory_space<smem>>
    %664 = vector.broadcast %663 : f32 to vector<2x256xf32>
    %665 = arith.mulf %664, %658 : vector<2x256xf32>
    %666 = arith.addf %652, %665 : vector<2x256xf32>
    %c60_118 = arith.constant 60 : index
    %667 = memref.load %arg5[%c60_118] : memref<81xf32, #tpu.memory_space<smem>>
    %668 = vector.broadcast %667 : f32 to vector<2x256xf32>
    %669 = arith.mulf %668, %658 : vector<2x256xf32>
    %670 = arith.addf %656, %669 : vector<2x256xf32>
    %c241_i32_119 = arith.constant 241 : i32
    %671 = tpu.dynamic_rotate %408 by %c241_i32_119 dim 1 : vector<2x256xf32>, i32 -> vector<2x256xf32>
    %672 = arith.mulf %671, %17 : vector<2x256xf32>
    %c15_120 = arith.constant 15 : index
    %673 = memref.load %arg5[%c15_120] : memref<81xf32, #tpu.memory_space<smem>>
    %674 = vector.broadcast %673 : f32 to vector<2x256xf32>
    %675 = arith.mulf %674, %672 : vector<2x256xf32>
    %676 = arith.addf %662, %675 : vector<2x256xf32>
    %c42_121 = arith.constant 42 : index
    %677 = memref.load %arg5[%c42_121] : memref<81xf32, #tpu.memory_space<smem>>
    %678 = vector.broadcast %677 : f32 to vector<2x256xf32>
    %679 = arith.mulf %678, %672 : vector<2x256xf32>
    %680 = arith.addf %666, %679 : vector<2x256xf32>
    %c69_122 = arith.constant 69 : index
    %681 = memref.load %arg5[%c69_122] : memref<81xf32, #tpu.memory_space<smem>>
    %682 = vector.broadcast %681 : f32 to vector<2x256xf32>
    %683 = arith.mulf %682, %672 : vector<2x256xf32>
    %684 = arith.addf %670, %683 : vector<2x256xf32>
    %c241_i32_123 = arith.constant 241 : i32
    %685 = tpu.dynamic_rotate %413 by %c241_i32_123 dim 1 : vector<2x256xf32>, i32 -> vector<2x256xf32>
    %686 = arith.mulf %685, %17 : vector<2x256xf32>
    %c24_124 = arith.constant 24 : index
    %687 = memref.load %arg5[%c24_124] : memref<81xf32, #tpu.memory_space<smem>>
    %688 = vector.broadcast %687 : f32 to vector<2x256xf32>
    %689 = arith.mulf %688, %686 : vector<2x256xf32>
    %690 = arith.addf %676, %689 : vector<2x256xf32>
    %c51_125 = arith.constant 51 : index
    %691 = memref.load %arg5[%c51_125] : memref<81xf32, #tpu.memory_space<smem>>
    %692 = vector.broadcast %691 : f32 to vector<2x256xf32>
    %693 = arith.mulf %692, %686 : vector<2x256xf32>
    %694 = arith.addf %680, %693 : vector<2x256xf32>
    %c78_126 = arith.constant 78 : index
    %695 = memref.load %arg5[%c78_126] : memref<81xf32, #tpu.memory_space<smem>>
    %696 = vector.broadcast %695 : f32 to vector<2x256xf32>
    %697 = arith.mulf %696, %686 : vector<2x256xf32>
    %698 = arith.addf %684, %697 : vector<2x256xf32>
    %c240_i32_127 = arith.constant 240 : i32
    %699 = tpu.dynamic_rotate %403 by %c240_i32_127 dim 1 : vector<2x256xf32>, i32 -> vector<2x256xf32>
    %700 = arith.mulf %699, %20 : vector<2x256xf32>
    %c7_128 = arith.constant 7 : index
    %701 = memref.load %arg5[%c7_128] : memref<81xf32, #tpu.memory_space<smem>>
    %702 = vector.broadcast %701 : f32 to vector<2x256xf32>
    %703 = arith.mulf %702, %700 : vector<2x256xf32>
    %704 = arith.addf %690, %703 : vector<2x256xf32>
    %c34_129 = arith.constant 34 : index
    %705 = memref.load %arg5[%c34_129] : memref<81xf32, #tpu.memory_space<smem>>
    %706 = vector.broadcast %705 : f32 to vector<2x256xf32>
    %707 = arith.mulf %706, %700 : vector<2x256xf32>
    %708 = arith.addf %694, %707 : vector<2x256xf32>
    %c61_130 = arith.constant 61 : index
    %709 = memref.load %arg5[%c61_130] : memref<81xf32, #tpu.memory_space<smem>>
    %710 = vector.broadcast %709 : f32 to vector<2x256xf32>
    %711 = arith.mulf %710, %700 : vector<2x256xf32>
    %712 = arith.addf %698, %711 : vector<2x256xf32>
    %c240_i32_131 = arith.constant 240 : i32
    %713 = tpu.dynamic_rotate %408 by %c240_i32_131 dim 1 : vector<2x256xf32>, i32 -> vector<2x256xf32>
    %714 = arith.mulf %713, %20 : vector<2x256xf32>
    %c16_132 = arith.constant 16 : index
    %715 = memref.load %arg5[%c16_132] : memref<81xf32, #tpu.memory_space<smem>>
    %716 = vector.broadcast %715 : f32 to vector<2x256xf32>
    %717 = arith.mulf %716, %714 : vector<2x256xf32>
    %718 = arith.addf %704, %717 : vector<2x256xf32>
    %c43_133 = arith.constant 43 : index
    %719 = memref.load %arg5[%c43_133] : memref<81xf32, #tpu.memory_space<smem>>
    %720 = vector.broadcast %719 : f32 to vector<2x256xf32>
    %721 = arith.mulf %720, %714 : vector<2x256xf32>
    %722 = arith.addf %708, %721 : vector<2x256xf32>
    %c70_134 = arith.constant 70 : index
    %723 = memref.load %arg5[%c70_134] : memref<81xf32, #tpu.memory_space<smem>>
    %724 = vector.broadcast %723 : f32 to vector<2x256xf32>
    %725 = arith.mulf %724, %714 : vector<2x256xf32>
    %726 = arith.addf %712, %725 : vector<2x256xf32>
    %c240_i32_135 = arith.constant 240 : i32
    %727 = tpu.dynamic_rotate %413 by %c240_i32_135 dim 1 : vector<2x256xf32>, i32 -> vector<2x256xf32>
    %728 = arith.mulf %727, %20 : vector<2x256xf32>
    %c25_136 = arith.constant 25 : index
    %729 = memref.load %arg5[%c25_136] : memref<81xf32, #tpu.memory_space<smem>>
    %730 = vector.broadcast %729 : f32 to vector<2x256xf32>
    %731 = arith.mulf %730, %728 : vector<2x256xf32>
    %732 = arith.addf %718, %731 : vector<2x256xf32>
    %c52_137 = arith.constant 52 : index
    %733 = memref.load %arg5[%c52_137] : memref<81xf32, #tpu.memory_space<smem>>
    %734 = vector.broadcast %733 : f32 to vector<2x256xf32>
    %735 = arith.mulf %734, %728 : vector<2x256xf32>
    %736 = arith.addf %722, %735 : vector<2x256xf32>
    %c79_138 = arith.constant 79 : index
    %737 = memref.load %arg5[%c79_138] : memref<81xf32, #tpu.memory_space<smem>>
    %738 = vector.broadcast %737 : f32 to vector<2x256xf32>
    %739 = arith.mulf %738, %728 : vector<2x256xf32>
    %740 = arith.addf %726, %739 : vector<2x256xf32>
    %c239_i32_139 = arith.constant 239 : i32
    %741 = tpu.dynamic_rotate %403 by %c239_i32_139 dim 1 : vector<2x256xf32>, i32 -> vector<2x256xf32>
    %742 = arith.mulf %741, %23 : vector<2x256xf32>
    %c8_140 = arith.constant 8 : index
    %743 = memref.load %arg5[%c8_140] : memref<81xf32, #tpu.memory_space<smem>>
    %744 = vector.broadcast %743 : f32 to vector<2x256xf32>
    %745 = arith.mulf %744, %742 : vector<2x256xf32>
    %746 = arith.addf %732, %745 : vector<2x256xf32>
    %c35_141 = arith.constant 35 : index
    %747 = memref.load %arg5[%c35_141] : memref<81xf32, #tpu.memory_space<smem>>
    %748 = vector.broadcast %747 : f32 to vector<2x256xf32>
    %749 = arith.mulf %748, %742 : vector<2x256xf32>
    %750 = arith.addf %736, %749 : vector<2x256xf32>
    %c62_142 = arith.constant 62 : index
    %751 = memref.load %arg5[%c62_142] : memref<81xf32, #tpu.memory_space<smem>>
    %752 = vector.broadcast %751 : f32 to vector<2x256xf32>
    %753 = arith.mulf %752, %742 : vector<2x256xf32>
    %754 = arith.addf %740, %753 : vector<2x256xf32>
    %c239_i32_143 = arith.constant 239 : i32
    %755 = tpu.dynamic_rotate %408 by %c239_i32_143 dim 1 : vector<2x256xf32>, i32 -> vector<2x256xf32>
    %756 = arith.mulf %755, %23 : vector<2x256xf32>
    %c17_144 = arith.constant 17 : index
    %757 = memref.load %arg5[%c17_144] : memref<81xf32, #tpu.memory_space<smem>>
    %758 = vector.broadcast %757 : f32 to vector<2x256xf32>
    %759 = arith.mulf %758, %756 : vector<2x256xf32>
    %760 = arith.addf %746, %759 : vector<2x256xf32>
    %c44_145 = arith.constant 44 : index
    %761 = memref.load %arg5[%c44_145] : memref<81xf32, #tpu.memory_space<smem>>
    %762 = vector.broadcast %761 : f32 to vector<2x256xf32>
    %763 = arith.mulf %762, %756 : vector<2x256xf32>
    %764 = arith.addf %750, %763 : vector<2x256xf32>
    %c71_146 = arith.constant 71 : index
    %765 = memref.load %arg5[%c71_146] : memref<81xf32, #tpu.memory_space<smem>>
    %766 = vector.broadcast %765 : f32 to vector<2x256xf32>
    %767 = arith.mulf %766, %756 : vector<2x256xf32>
    %768 = arith.addf %754, %767 : vector<2x256xf32>
    %c239_i32_147 = arith.constant 239 : i32
    %769 = tpu.dynamic_rotate %413 by %c239_i32_147 dim 1 : vector<2x256xf32>, i32 -> vector<2x256xf32>
    %770 = arith.mulf %769, %23 : vector<2x256xf32>
    %c26_148 = arith.constant 26 : index
    %771 = memref.load %arg5[%c26_148] : memref<81xf32, #tpu.memory_space<smem>>
    %772 = vector.broadcast %771 : f32 to vector<2x256xf32>
    %773 = arith.mulf %772, %770 : vector<2x256xf32>
    %774 = arith.addf %760, %773 : vector<2x256xf32>
    %c53_149 = arith.constant 53 : index
    %775 = memref.load %arg5[%c53_149] : memref<81xf32, #tpu.memory_space<smem>>
    %776 = vector.broadcast %775 : f32 to vector<2x256xf32>
    %777 = arith.mulf %776, %770 : vector<2x256xf32>
    %778 = arith.addf %764, %777 : vector<2x256xf32>
    %c80_150 = arith.constant 80 : index
    %779 = memref.load %arg5[%c80_150] : memref<81xf32, #tpu.memory_space<smem>>
    %780 = vector.broadcast %779 : f32 to vector<2x256xf32>
    %781 = arith.mulf %780, %770 : vector<2x256xf32>
    %782 = arith.addf %768, %781 : vector<2x256xf32>
    %c0_151 = arith.constant 0 : index
    %783 = memref.load %arg6[%c0_151] : memref<3xf32, #tpu.memory_space<smem>>
    %784 = vector.broadcast %783 : f32 to vector<2x256xf32>
    %785 = arith.addf %774, %784 : vector<2x256xf32>
    %cst_152 = arith.constant 0.000000e+00 : f32
    %786 = vector.broadcast %cst_152 : f32 to vector<2x256xf32>
    %787 = arith.maximumf %785, %786 : vector<2x256xf32>
    %788 = arith.addf %787, %25 : vector<2x256xf32>
    %c0_153 = arith.constant 0 : index
    %c0_154 = arith.constant 0 : index
    %c0_155 = arith.constant 0 : index
    %789 = vector.load %arg7[%c0_153, %c0_154, %c0_155] : memref<3x2x256xf32, #tpu.memory_space<vmem>>, vector<1x2x256xf32>
    %790 = vector.shape_cast %789 : vector<1x2x256xf32> to vector<2x256xf32>
    %791 = vector.shape_cast %788 : vector<2x256xf32> to vector<1x2x256xf32>
    tpu.vector_store %arg7[%c0_153, %c0_154, %c0_155], %791 {strides = array<i32>} : memref<3x2x256xf32, #tpu.memory_space<vmem>>, vector<1x2x256xf32>,
    %c1_156 = arith.constant 1 : index
    %792 = memref.load %arg6[%c1_156] : memref<3xf32, #tpu.memory_space<smem>>
    %793 = vector.broadcast %792 : f32 to vector<2x256xf32>
    %794 = arith.addf %778, %793 : vector<2x256xf32>
    %cst_157 = arith.constant 0.000000e+00 : f32
    %795 = vector.broadcast %cst_157 : f32 to vector<2x256xf32>
    %796 = arith.maximumf %794, %795 : vector<2x256xf32>
    %797 = arith.addf %796, %27 : vector<2x256xf32>
    %c1_158 = arith.constant 1 : index
    %c0_159 = arith.constant 0 : index
    %c0_160 = arith.constant 0 : index
    %798 = vector.load %arg7[%c1_158, %c0_159, %c0_160] : memref<3x2x256xf32, #tpu.memory_space<vmem>>, vector<1x2x256xf32>
    %799 = vector.shape_cast %798 : vector<1x2x256xf32> to vector<2x256xf32>
    %800 = vector.shape_cast %797 : vector<2x256xf32> to vector<1x2x256xf32>
    tpu.vector_store %arg7[%c1_158, %c0_159, %c0_160], %800 {strides = array<i32>} : memref<3x2x256xf32, #tpu.memory_space<vmem>>, vector<1x2x256xf32>,
    %c2_161 = arith.constant 2 : index
    %801 = memref.load %arg6[%c2_161] : memref<3xf32, #tpu.memory_space<smem>>
    %802 = vector.broadcast %801 : f32 to vector<2x256xf32>
    %803 = arith.addf %782, %802 : vector<2x256xf32>
    %cst_162 = arith.constant 0.000000e+00 : f32
    %804 = vector.broadcast %cst_162 : f32 to vector<2x256xf32>
    %805 = arith.maximumf %803, %804 : vector<2x256xf32>
    %806 = arith.addf %805, %29 : vector<2x256xf32>
    %c2_163 = arith.constant 2 : index
    %c0_164 = arith.constant 0 : index
    %c0_165 = arith.constant 0 : index
    %807 = vector.load %arg7[%c2_163, %c0_164, %c0_165] : memref<3x2x256xf32, #tpu.memory_space<vmem>>, vector<1x2x256xf32>
    %808 = vector.shape_cast %807 : vector<1x2x256xf32> to vector<2x256xf32>
    %809 = vector.shape_cast %806 : vector<2x256xf32> to vector<1x2x256xf32>
    tpu.vector_store %arg7[%c2_163, %c0_164, %c0_165], %809 {strides = array<i32>} : memref<3x2x256xf32, #tpu.memory_space<vmem>>, vector<1x2x256xf32>,
    return
  }
  func.func @transform_0(%arg0: i32) -> (i32, i32, i32) {
    %c0_i32 = arith.constant 0 : i32
    %c0_i32_0 = arith.constant 0 : i32
    %c0_i32_1 = arith.constant 0 : i32
    return %c0_i32, %arg0, %c0_i32_0 : i32, i32, i32
  }
  func.func @transform_1(%arg0: i32) -> (i32, i32) {
    %c0_i32 = arith.constant 0 : i32
    %c0_i32_0 = arith.constant 0 : i32
    %c0_i32_1 = arith.constant 0 : i32
    return %c0_i32, %c0_i32_0 : i32, i32
  }
  func.func @transform_2(%arg0: i32) -> i32 {
    %c0_i32 = arith.constant 0 : i32
    %c0_i32_0 = arith.constant 0 : i32
    return %c0_i32 : i32
  }
  func.func @transform_3(%arg0: i32) -> i32 {
    %c0_i32 = arith.constant 0 : i32
    %c0_i32_0 = arith.constant 0 : i32
    return %c0_i32 : i32
  }
  func.func @transform_4(%arg0: i32) -> i32 {
    %c0_i32 = arith.constant 0 : i32
    %c0_i32_0 = arith.constant 0 : i32
    return %c0_i32 : i32
  }
  func.func @transform_5(%arg0: i32) -> i32 {
    %c0_i32 = arith.constant 0 : i32
    %c0_i32_0 = arith.constant 0 : i32
    return %c0_i32 : i32
  }
  func.func @transform_6(%arg0: i32) -> (i32, i32, i32) {
    %c0_i32 = arith.constant 0 : i32
    %c0_i32_0 = arith.constant 0 : i32
    %c0_i32_1 = arith.constant 0 : i32
    return %c0_i32, %arg0, %c0_i32_0 : i32, i32, i32
  }
}

</mosaic_0001>

<llo_original>
// kernel: simple_residual_block.1
$region0: #{simple_residual_block.1}
  #allocation0 [shape = 'u32[]', space=smem, size = 0x4, offset = 0x4, fixed_abs, tag = 'smem constant byte address 0x4 - core index']
  #allocation1 [shape = 'u32[72,128]{1,0:T(1,128)}', space=vmem, size = 0x9000, scoped, tag = 'internal scratch']
  %s0 = inlined_call_operand.vmem [shape: f32[3,2,256], index: 0, kind: input, shape index: {}]
  %s1 = inlined_call_operand.vmem [shape: f32[8,256], index: 1, kind: input, shape index: {}]
  %s2 = inlined_call_operand.vmem [shape: f32[81], index: 2, kind: input, shape index: {}]
  %s3 = inlined_call_operand.vmem [shape: f32[3], index: 3, kind: input, shape index: {}]
  %s4 = inlined_call_operand.vmem [shape: f32[81], index: 4, kind: input, shape index: {}]
  %s5 = inlined_call_operand.vmem [shape: f32[3], index: 5, kind: input, shape index: {}]
  %s6 = inlined_call_operand.vmem [shape: f32[3,2,256], index: 6, kind: output, shape index: {}]
  %s7 = sld [smem:[#allocation0]]
  $region50: #{simple_residual_block.1} parent=0
    _
  %s9 = ssub.s32 1, %s7
  %s10 = scalar_select 0, %s9, %s7
  $region1: #{simple_residual_block.1} parent=0
    #allocation2 [shape = 'u8[512]{0}', space=smem, size = 0x200, scoped, tag = 'input window, operand 2, single buffered']
    #allocation3 [shape = 's32[1]{0}', space=sflag, size = 0x4, scoped, tag = 'scoped memory for simple_residual_block.1']
    #allocation4 [shape = 'u8[512]{0}', space=smem, size = 0x200, scoped, tag = 'input window, operand 3, single buffered']
    #allocation5 [shape = 's32[1]{0}', space=sflag, size = 0x4, scoped, tag = 'scoped memory for simple_residual_block.1']
    #allocation6 [shape = 'u8[512]{0}', space=smem, size = 0x200, scoped, tag = 'input window, operand 4, single buffered']
    #allocation7 [shape = 'u8[512]{0}', space=smem, size = 0x200, scoped, tag = 'input window, operand 5, single buffered']
    #allocation8 [shape = 's32[1]{0}', space=sflag, size = 0x4, scoped, tag = 'scoped memory for simple_residual_block.1']
    %11 = vsyncpa [#allocation3], 0
    %12 = vsyncpa [#allocation5], 0
    %13 = vsyncpa [#allocation8], 0
    // Predicated region
    $region2: #{simple_residual_block.1} parent=1 // pred_check
      _
    $region3: #{simple_residual_block.1} parent=1 // pred_check_branch
      %15 = sbr.rel (0) target = $region5
    $region4: #{simple_residual_block.1} parent=1 // pred_region
      _
    $region5: #{simple_residual_block.1} parent=1 // pred_fallthru
      _
    // Predicated region
    $region6: #{simple_residual_block.1} parent=1 // pred_check
      _
    $region7: #{simple_residual_block.1} parent=1 // pred_check_branch
      %17 = sbr.rel (0) target = $region9
    $region8: #{simple_residual_block.1} parent=1 // pred_region
      _
    $region9: #{simple_residual_block.1} parent=1 // pred_fallthru
      _
    // Predicated region
    $region10: #{simple_residual_block.1} parent=1 // pred_check
      _
    $region11: #{simple_residual_block.1} parent=1 // pred_check_branch
      %19 = sbr.rel (0) target = $region13
    $region12: #{simple_residual_block.1} parent=1 // pred_region
      %21 = vsyncadd [#allocation3], 0
      %s23 = sshll.u32 %s2, 4
      %s24 = int_to_ptr.vmem [resolvable:$true] %s23
      %26 = dma.vmem_to_smem %s24, 16, [#allocation2], [#allocation3]
    $region13: #{simple_residual_block.1} parent=1 // pred_fallthru
      _
    // Predicated region
    $region14: #{simple_residual_block.1} parent=1 // pred_check
      _
    $region15: #{simple_residual_block.1} parent=1 // pred_check_branch
      %28 = sbr.rel (0) target = $region17
    $region16: #{simple_residual_block.1} parent=1 // pred_region
      %30 = vsyncadd [#allocation5], 0
      %s32 = sshll.u32 %s3, 4
      %s33 = int_to_ptr.vmem [resolvable:$true] %s32
      %35 = dma.vmem_to_smem %s33, 16, [#allocation4], [#allocation5]
    $region17: #{simple_residual_block.1} parent=1 // pred_fallthru
      _
    // Predicated region
    $region18: #{simple_residual_block.1} parent=1 // pred_check
      _
    $region19: #{simple_residual_block.1} parent=1 // pred_check_branch
      %37 = sbr.rel (0) target = $region21
    $region20: #{simple_residual_block.1} parent=1 // pred_region
      %39 = vsyncadd [#allocation5], 0
      %s41 = sshll.u32 %s4, 4
      %s42 = int_to_ptr.vmem [resolvable:$true] %s41
      %44 = dma.vmem_to_smem %s42, 16, [#allocation6], [#allocation5]
    $region21: #{simple_residual_block.1} parent=1 // pred_fallthru
      _
    // Predicated region
    $region22: #{simple_residual_block.1} parent=1 // pred_check
      _
    $region23: #{simple_residual_block.1} parent=1 // pred_check_branch
      %46 = sbr.rel (0) target = $region25
    $region24: #{simple_residual_block.1} parent=1 // pred_region
      %48 = vsyncadd [#allocation8], 0
      %s50 = sshll.u32 %s5, 4
      %s51 = int_to_ptr.vmem [resolvable:$true] %s50
      %53 = dma.vmem_to_smem %s51, 16, [#allocation7], [#allocation8]
    $region25: #{simple_residual_block.1} parent=1 // pred_fallthru
      _
    // Predicated region
    $region26: #{simple_residual_block.1} parent=1 // pred_check
      _
    $region27: #{simple_residual_block.1} parent=1 // pred_check_branch
      %55 = sbr.rel (0) target = $region29
    $region28: #{simple_residual_block.1} parent=1 // pred_region
      %57 = dma.done [#allocation3], 16
    $region29: #{simple_residual_block.1} parent=1 // pred_fallthru
      _
    // Predicated region
    $region30: #{simple_residual_block.1} parent=1 // pred_check
      _
    $region31: #{simple_residual_block.1} parent=1 // pred_check_branch
      %59 = sbr.rel (0) target = $region33
    $region32: #{simple_residual_block.1} parent=1 // pred_region
      %61 = dma.done [#allocation5], 16
    $region33: #{simple_residual_block.1} parent=1 // pred_fallthru
      _
    // Predicated region
    $region34: #{simple_residual_block.1} parent=1 // pred_check
      _
    $region35: #{simple_residual_block.1} parent=1 // pred_check_branch
      %63 = sbr.rel (0) target = $region37
    $region36: #{simple_residual_block.1} parent=1 // pred_region
      %65 = dma.done [#allocation5], 16
    $region37: #{simple_residual_block.1} parent=1 // pred_fallthru
      _
    // Predicated region
    $region38: #{simple_residual_block.1} parent=1 // pred_check
      _
    $region39: #{simple_residual_block.1} parent=1 // pred_check_branch
      %67 = sbr.rel (0) target = $region41
    $region40: #{simple_residual_block.1} parent=1 // pred_region
      %69 = dma.done [#allocation8], 16
    $region41: #{simple_residual_block.1} parent=1 // pred_fallthru
      _
    %70 = sfence
    %v71 = vld [vmem:[%s1] ss:$8 sm:$0x3]
    %v73 = vperm.slane %v71, 0
    %v74 = vperm.slane %v71, 1
    %s77 = scalar_lea.vmem %s1, 1
    %v78 = vld [vmem:[%s77] ss:$8 sm:$0x3]
    %v80 = vperm.slane %v78, 0
    %v81 = vperm.slane %v78, 1
    %s84 = scalar_lea.vmem %s1, 2
    %v85 = vld [vmem:[%s84] ss:$8 sm:$0x3]
    %v87 = vperm.slane %v85, 0
    %v88 = vperm.slane %v85, 1
    %s91 = scalar_lea.vmem %s1, 3
    %v92 = vld [vmem:[%s91] ss:$8 sm:$0x3]
    %v94 = vperm.slane %v92, 0
    %v95 = vperm.slane %v92, 1
    %s98 = scalar_lea.vmem %s1, 4
    %v99 = vld [vmem:[%s98] ss:$8 sm:$0x3]
    %v101 = vperm.slane %v99, 0
    %v102 = vperm.slane %v99, 1
    %s105 = scalar_lea.vmem %s1, 5
    %v106 = vld [vmem:[%s105] ss:$8 sm:$0x3]
    %v108 = vperm.slane %v106, 0
    %v109 = vperm.slane %v106, 1
    %s112 = scalar_lea.vmem %s1, 6
    %v113 = vld [vmem:[%s112] ss:$8 sm:$0x3]
    %v115 = vperm.slane %v113, 0
    %v116 = vperm.slane %v113, 1
    %s119 = scalar_lea.vmem %s1, 7
    %v120 = vld [vmem:[%s119] ss:$8 sm:$0x3]
    %v122 = vperm.slane %v120, 0
    %v123 = vperm.slane %v120, 1
    %v126 = vld [vmem:[%s0] sm:$0xf]
    %s127 = scalar_lea.vmem %s0, 4
    %v128 = vld [vmem:[%s127] sm:$0xf]
    %s129 = scalar_lea.vmem %s0, 8
    %v130 = vld [vmem:[%s129] sm:$0xf]
    %s131 = sld [smem:[#allocation2 + $0x4]]
    %v132 = vstv %s131
    %v133 = vmul.f32 %v132, %v126
    %s134 = sld [smem:[#allocation2 + $0x1f]]
    %v135 = vstv %s134
    %v136 = vmul.f32 %v135, %v126
    %s137 = sld [smem:[#allocation2 + $0x3a]]
    %v138 = vstv %s137
    %v139 = vmul.f32 %v138, %v126
    %s140 = sld [smem:[#allocation2 + $0xd]]
    %v141 = vstv %s140
    %v142 = vmul.f32 %v141, %v128
    %v143 = vadd.f32 %v133, %v142
    %s144 = sld [smem:[#allocation2 + $0x28]]
    %v145 = vstv %s144
    %v146 = vmul.f32 %v145, %v128
    %v147 = vadd.f32 %v136, %v146
    %s148 = sld [smem:[#allocation2 + $0x43]]
    %v149 = vstv %s148
    %v150 = vmul.f32 %v149, %v128
    %v151 = vadd.f32 %v139, %v150
    %s152 = sld [smem:[#allocation2 + $0x16]]
    %v153 = vstv %s152
    %v154 = vmul.f32 %v153, %v130
    %v155 = vadd.f32 %v143, %v154
    %s156 = sld [smem:[#allocation2 + $0x31]]
    %v157 = vstv %s156
    %v158 = vmul.f32 %v157, %v130
    %v159 = vadd.f32 %v147, %v158
    %s160 = sld [smem:[#allocation2 + $0x4c]]
    %v161 = vstv %s160
    %v162 = vmul.f32 %v161, %v130
    %v163 = vadd.f32 %v151, %v162
    %165 = vst [vmem:[#allocation1] ss:$4 sm:$0xff] %v126
    %v166 = vld.sshfl [vmem:[#allocation1] sm:$0xff pattern:$0x73625140]
    %v167 = vld.sshfl [vmem:[#allocation1 + $0x8] sm:$0xff pattern:$0x73625140]
    %170 = vrot.lane.b32.xlu0 %v166, 17
    %v171 = vpop.permute.xlu0 %170
    %172 = vrot.lane.b32.xlu0 %v167, 17
    %v173 = vpop.permute.xlu0 %172
    %v174 = vlaneseq
    %v175 = vand.u32 %v174, 127
    %vm176 = vcmp.lt.s32.totalorder %v175, 17
    %v177 = vsel %vm176, %v171, %v173
    %v178 = vsel %vm176, %v173, %v171
    %v179 = vmul.f32 %v178, %v73
    %v180 = vmul.f32 %v177, %v74
    %s181 = sld [smem:[#allocation2]]
    %v182 = vstv %s181
    %v183 = vmul.f32 %v182, %v179
    %v184 = vmul.f32 %v182, %v180
    %v187 = vrot.slane %v184, 6
    %vm188 = vcmask 1041408
    %v189 = vsel %vm188, %v183, %v187
    %v191 = vadd.f32 %v155, %v189
    %s192 = sld [smem:[#allocation2 + $0x1b]]
    %v193 = vstv %s192
    %v194 = vmul.f32 %v193, %v179
    %v195 = vmul.f32 %v193, %v180
    %v198 = vrot.slane %v195, 6
    %v199 = vsel %vm188, %v194, %v198
    %v201 = vadd.f32 %v159, %v199
    %s202 = sld [smem:[#allocation2 + $0x36]]
    %v203 = vstv %s202
    %v204 = vmul.f32 %v203, %v179
    %v205 = vmul.f32 %v203, %v180
    %v208 = vrot.slane %v205, 6
    %v209 = vsel %vm188, %v204, %v208
    %v211 = vadd.f32 %v163, %v209
    %213 = vst [vmem:[#allocation1] ss:$4 sm:$0xff] %v128
    %v214 = vld.sshfl [vmem:[#allocation1] sm:$0xff pattern:$0x73625140]
    %v215 = vld.sshfl [vmem:[#allocation1 + $0x8] sm:$0xff pattern:$0x73625140]
    %218 = vrot.lane.b32.xlu0 %v214, 17
    %v219 = vpop.permute.xlu0 %218
    %220 = vrot.lane.b32.xlu0 %v215, 17
    %v221 = vpop.permute.xlu0 %220
    %v222 = vsel %vm176, %v219, %v221
    %v223 = vsel %vm176, %v221, %v219
    %v224 = vmul.f32 %v223, %v73
    %v225 = vmul.f32 %v222, %v74
    %s226 = sld [smem:[#allocation2 + $0x9]]
    %v227 = vstv %s226
    %v228 = vmul.f32 %v227, %v224
    %v229 = vmul.f32 %v227, %v225
    %v232 = vrot.slane %v229, 6
    %v233 = vsel %vm188, %v228, %v232
    %v235 = vadd.f32 %v191, %v233
    %s236 = sld [smem:[#allocation2 + $0x24]]
    %v237 = vstv %s236
    %v238 = vmul.f32 %v237, %v224
    %v239 = vmul.f32 %v237, %v225
    %v242 = vrot.slane %v239, 6
    %v243 = vsel %vm188, %v238, %v242
    %v245 = vadd.f32 %v201, %v243
    %s246 = sld [smem:[#allocation2 + $0x3f]]
    %v247 = vstv %s246
    %v248 = vmul.f32 %v247, %v224
    %v249 = vmul.f32 %v247, %v225
    %v252 = vrot.slane %v249, 6
    %v253 = vsel %vm188, %v248, %v252
    %v255 = vadd.f32 %v211, %v253
    %257 = vst [vmem:[#allocation1] ss:$4 sm:$0xff] %v130
    %v258 = vld.sshfl [vmem:[#allocation1] sm:$0xff pattern:$0x73625140]
    %v259 = vld.sshfl [vmem:[#allocation1 + $0x8] sm:$0xff pattern:$0x73625140]
    %262 = vrot.lane.b32.xlu0 %v258, 17
    %v263 = vpop.permute.xlu0 %262
    %264 = vrot.lane.b32.xlu0 %v259, 17
    %v265 = vpop.permute.xlu0 %264
    %v266 = vsel %vm176, %v263, %v265
    %v267 = vsel %vm176, %v265, %v263
    %v268 = vmul.f32 %v267, %v73
    %v269 = vmul.f32 %v266, %v74
    %s270 = sld [smem:[#allocation2 + $0x12]]
    %v271 = vstv %s270
    %v272 = vmul.f32 %v271, %v268
    %v273 = vmul.f32 %v271, %v269
    %v276 = vrot.slane %v273, 6
    %v277 = vsel %vm188, %v272, %v276
    %v279 = vadd.f32 %v235, %v277
    %s280 = sld [smem:[#allocation2 + $0x2d]]
    %v281 = vstv %s280
    %v282 = vmul.f32 %v281, %v268
    %v283 = vmul.f32 %v281, %v269
    %v286 = vrot.slane %v283, 6
    %v287 = vsel %vm188, %v282, %v286
    %v289 = vadd.f32 %v245, %v287
    %s290 = sld [smem:[#allocation2 + $0x48]]
    %v291 = vstv %s290
    %v292 = vmul.f32 %v291, %v268
    %v293 = vmul.f32 %v291, %v269
    %v296 = vrot.slane %v293, 6
    %v297 = vsel %vm188, %v292, %v296
    %v299 = vadd.f32 %v255, %v297
    %300 = vst [vmem:[#allocation1] ss:$4 sm:$0xff] %v126
    %v301 = vld.sshfl [vmem:[#allocation1] sm:$0xff pattern:$0x73625140]
    %v302 = vld.sshfl [vmem:[#allocation1 + $0x8] sm:$0xff pattern:$0x73625140]
    %305 = vrot.lane.b32.xlu0 %v301, 16
    %v306 = vpop.permute.xlu0 %305
    %307 = vrot.lane.b32.xlu0 %v302, 16
    %v308 = vpop.permute.xlu0 %307
    %vm309 = vcmp.lt.s32.totalorder %v175, 16
    %v310 = vsel %vm309, %v306, %v308
    %v311 = vsel %vm309, %v308, %v306
    %v312 = vmul.f32 %v311, %v80
    %v313 = vmul.f32 %v310, %v81
    %s314 = sld [smem:[#allocation2 + $0x1]]
    %v315 = vstv %s314
    %v316 = vmul.f32 %v315, %v312
    %v317 = vmul.f32 %v315, %v313
    %v320 = vrot.slane %v317, 6
    %v321 = vsel %vm188, %v316, %v320
    %v323 = vadd.f32 %v279, %v321
    %s324 = sld [smem:[#allocation2 + $0x1c]]
    %v325 = vstv %s324
    %v326 = vmul.f32 %v325, %v312
    %v327 = vmul.f32 %v325, %v313
    %v330 = vrot.slane %v327, 6
    %v331 = vsel %vm188, %v326, %v330
    %v333 = vadd.f32 %v289, %v331
    %s334 = sld [smem:[#allocation2 + $0x37]]
    %v335 = vstv %s334
    %v336 = vmul.f32 %v335, %v312
    %v337 = vmul.f32 %v335, %v313
    %v340 = vrot.slane %v337, 6
    %v341 = vsel %vm188, %v336, %v340
    %v343 = vadd.f32 %v299, %v341
    %344 = vst [vmem:[#allocation1] ss:$4 sm:$0xff] %v128
    %v345 = vld.sshfl [vmem:[#allocation1] sm:$0xff pattern:$0x73625140]
    %v346 = vld.sshfl [vmem:[#allocation1 + $0x8] sm:$0xff pattern:$0x73625140]
    %349 = vrot.lane.b32.xlu0 %v345, 16
    %v350 = vpop.permute.xlu0 %349
    %351 = vrot.lane.b32.xlu0 %v346, 16
    %v352 = vpop.permute.xlu0 %351
    %v353 = vsel %vm309, %v350, %v352
    %v354 = vsel %vm309, %v352, %v350
    %v355 = vmul.f32 %v354, %v80
    %v356 = vmul.f32 %v353, %v81
    %s357 = sld [smem:[#allocation2 + $0xa]]
    %v358 = vstv %s357
    %v359 = vmul.f32 %v358, %v355
    %v360 = vmul.f32 %v358, %v356
    %v363 = vrot.slane %v360, 6
    %v364 = vsel %vm188, %v359, %v363
    %v366 = vadd.f32 %v323, %v364
    %s367 = sld [smem:[#allocation2 + $0x25]]
    %v368 = vstv %s367
    %v369 = vmul.f32 %v368, %v355
    %v370 = vmul.f32 %v368, %v356
    %v373 = vrot.slane %v370, 6
    %v374 = vsel %vm188, %v369, %v373
    %v376 = vadd.f32 %v333, %v374
    %s377 = sld [smem:[#allocation2 + $0x40]]
    %v378 = vstv %s377
    %v379 = vmul.f32 %v378, %v355
    %v380 = vmul.f32 %v378, %v356
    %v383 = vrot.slane %v380, 6
    %v384 = vsel %vm188, %v379, %v383
    %v386 = vadd.f32 %v343, %v384
    %387 = vst [vmem:[#allocation1] ss:$4 sm:$0xff] %v130
    %v388 = vld.sshfl [vmem:[#allocation1] sm:$0xff pattern:$0x73625140]
    %v389 = vld.sshfl [vmem:[#allocation1 + $0x8] sm:$0xff pattern:$0x73625140]
    %392 = vrot.lane.b32.xlu0 %v388, 16
    %v393 = vpop.permute.xlu0 %392
    %394 = vrot.lane.b32.xlu0 %v389, 16
    %v395 = vpop.permute.xlu0 %394
    %v396 = vsel %vm309, %v393, %v395
    %v397 = vsel %vm309, %v395, %v393
    %v398 = vmul.f32 %v397, %v80
    %v399 = vmul.f32 %v396, %v81
    %s400 = sld [smem:[#allocation2 + $0x13]]
    %v401 = vstv %s400
    %v402 = vmul.f32 %v401, %v398
    %v403 = vmul.f32 %v401, %v399
    %v406 = vrot.slane %v403, 6
    %v407 = vsel %vm188, %v402, %v406
    %v409 = vadd.f32 %v366, %v407
    %s410 = sld [smem:[#allocation2 + $0x2e]]
    %v411 = vstv %s410
    %v412 = vmul.f32 %v411, %v398
    %v413 = vmul.f32 %v411, %v399
    %v416 = vrot.slane %v413, 6
    %v417 = vsel %vm188, %v412, %v416
    %v419 = vadd.f32 %v376, %v417
    %s420 = sld [smem:[#allocation2 + $0x49]]
    %v421 = vstv %s420
    %v422 = vmul.f32 %v421, %v398
    %v423 = vmul.f32 %v421, %v399
    %v426 = vrot.slane %v423, 6
    %v427 = vsel %vm188, %v422, %v426
    %v429 = vadd.f32 %v386, %v427
    %430 = vst [vmem:[#allocation1] ss:$4 sm:$0xff] %v126
    %v431 = vld.sshfl [vmem:[#allocation1] sm:$0xff pattern:$0x73625140]
    %v432 = vld.sshfl [vmem:[#allocation1 + $0x8] sm:$0xff pattern:$0x73625140]
    %435 = vrot.lane.b32.xlu0 %v431, 15
    %v436 = vpop.permute.xlu0 %435
    %437 = vrot.lane.b32.xlu0 %v432, 15
    %v438 = vpop.permute.xlu0 %437
    %vm439 = vcmp.lt.s32.totalorder %v175, 15
    %v440 = vsel %vm439, %v436, %v438
    %v441 = vsel %vm439, %v438, %v436
    %v442 = vmul.f32 %v441, %v87
    %v443 = vmul.f32 %v440, %v88
    %s444 = sld [smem:[#allocation2 + $0x2]]
    %v445 = vstv %s444
    %v446 = vmul.f32 %v445, %v442
    %v447 = vmul.f32 %v445, %v443
    %v450 = vrot.slane %v447, 6
    %v451 = vsel %vm188, %v446, %v450
    %v453 = vadd.f32 %v409, %v451
    %s454 = sld [smem:[#allocation2 + $0x1d]]
    %v455 = vstv %s454
    %v456 = vmul.f32 %v455, %v442
    %v457 = vmul.f32 %v455, %v443
    %v460 = vrot.slane %v457, 6
    %v461 = vsel %vm188, %v456, %v460
    %v463 = vadd.f32 %v419, %v461
    %s464 = sld [smem:[#allocation2 + $0x38]]
    %v465 = vstv %s464
    %v466 = vmul.f32 %v465, %v442
    %v467 = vmul.f32 %v465, %v443
    %v470 = vrot.slane %v467, 6
    %v471 = vsel %vm188, %v466, %v470
    %v473 = vadd.f32 %v429, %v471
    %474 = vst [vmem:[#allocation1] ss:$4 sm:$0xff] %v128
    %v475 = vld.sshfl [vmem:[#allocation1] sm:$0xff pattern:$0x73625140]
    %v476 = vld.sshfl [vmem:[#allocation1 + $0x8] sm:$0xff pattern:$0x73625140]
    %479 = vrot.lane.b32.xlu0 %v475, 15
    %v480 = vpop.permute.xlu0 %479
    %481 = vrot.lane.b32.xlu0 %v476, 15
    %v482 = vpop.permute.xlu0 %481
    %v483 = vsel %vm439, %v480, %v482
    %v484 = vsel %vm439, %v482, %v480
    %v485 = vmul.f32 %v484, %v87
    %v486 = vmul.f32 %v483, %v88
    %s487 = sld [smem:[#allocation2 + $0xb]]
    %v488 = vstv %s487
    %v489 = vmul.f32 %v488, %v485
    %v490 = vmul.f32 %v488, %v486
    %v493 = vrot.slane %v490, 6
    %v494 = vsel %vm188, %v489, %v493
    %v496 = vadd.f32 %v453, %v494
    %s497 = sld [smem:[#allocation2 + $0x26]]
    %v498 = vstv %s497
    %v499 = vmul.f32 %v498, %v485
    %v500 = vmul.f32 %v498, %v486
    %v503 = vrot.slane %v500, 6
    %v504 = vsel %vm188, %v499, %v503
    %v506 = vadd.f32 %v463, %v504
    %s507 = sld [smem:[#allocation2 + $0x41]]
    %v508 = vstv %s507
    %v509 = vmul.f32 %v508, %v485
    %v510 = vmul.f32 %v508, %v486
    %v513 = vrot.slane %v510, 6
    %v514 = vsel %vm188, %v509, %v513
    %v516 = vadd.f32 %v473, %v514
    %517 = vst [vmem:[#allocation1] ss:$4 sm:$0xff] %v130
    %v518 = vld.sshfl [vmem:[#allocation1] sm:$0xff pattern:$0x73625140]
    %v519 = vld.sshfl [vmem:[#allocation1 + $0x8] sm:$0xff pattern:$0x73625140]
    %522 = vrot.lane.b32.xlu0 %v518, 15
    %v523 = vpop.permute.xlu0 %522
    %524 = vrot.lane.b32.xlu0 %v519, 15
    %v525 = vpop.permute.xlu0 %524
    %v526 = vsel %vm439, %v523, %v525
    %v527 = vsel %vm439, %v525, %v523
    %v528 = vmul.f32 %v527, %v87
    %v529 = vmul.f32 %v526, %v88
    %s530 = sld [smem:[#allocation2 + $0x14]]
    %v531 = vstv %s530
    %v532 = vmul.f32 %v531, %v528
    %v533 = vmul.f32 %v531, %v529
    %v536 = vrot.slane %v533, 6
    %v537 = vsel %vm188, %v532, %v536
    %v539 = vadd.f32 %v496, %v537
    %s540 = sld [smem:[#allocation2 + $0x2f]]
    %v541 = vstv %s540
    %v542 = vmul.f32 %v541, %v528
    %v543 = vmul.f32 %v541, %v529
    %v546 = vrot.slane %v543, 6
    %v547 = vsel %vm188, %v542, %v546
    %v549 = vadd.f32 %v506, %v547
    %s550 = sld [smem:[#allocation2 + $0x4a]]
    %v551 = vstv %s550
    %v552 = vmul.f32 %v551, %v528
    %v553 = vmul.f32 %v551, %v529
    %v556 = vrot.slane %v553, 6
    %v557 = vsel %vm188, %v552, %v556
    %v559 = vadd.f32 %v516, %v557
    %560 = vst [vmem:[#allocation1] ss:$4 sm:$0xff] %v126
    %v561 = vld.sshfl [vmem:[#allocation1] sm:$0xff pattern:$0x73625140]
    %v562 = vld.sshfl [vmem:[#allocation1 + $0x8] sm:$0xff pattern:$0x73625140]
    %565 = vrot.lane.b32.xlu0 %v561, 1
    %v566 = vpop.permute.xlu0 %565
    %567 = vrot.lane.b32.xlu0 %v562, 1
    %v568 = vpop.permute.xlu0 %567
    %vm569 = vcmp.lt.s32.totalorder %v175, 1
    %v570 = vsel %vm569, %v566, %v568
    %v571 = vsel %vm569, %v568, %v566
    %v572 = vmul.f32 %v571, %v94
    %v573 = vmul.f32 %v570, %v95
    %s574 = sld [smem:[#allocation2 + $0x3]]
    %v575 = vstv %s574
    %v576 = vmul.f32 %v575, %v572
    %v577 = vmul.f32 %v575, %v573
    %v580 = vrot.slane %v577, 6
    %v581 = vsel %vm188, %v576, %v580
    %v583 = vadd.f32 %v539, %v581
    %s584 = sld [smem:[#allocation2 + $0x1e]]
    %v585 = vstv %s584
    %v586 = vmul.f32 %v585, %v572
    %v587 = vmul.f32 %v585, %v573
    %v590 = vrot.slane %v587, 6
    %v591 = vsel %vm188, %v586, %v590
    %v593 = vadd.f32 %v549, %v591
    %s594 = sld [smem:[#allocation2 + $0x39]]
    %v595 = vstv %s594
    %v596 = vmul.f32 %v595, %v572
    %v597 = vmul.f32 %v595, %v573
    %v600 = vrot.slane %v597, 6
    %v601 = vsel %vm188, %v596, %v600
    %v603 = vadd.f32 %v559, %v601
    %604 = vst [vmem:[#allocation1] ss:$4 sm:$0xff] %v128
    %v605 = vld.sshfl [vmem:[#allocation1] sm:$0xff pattern:$0x73625140]
    %v606 = vld.sshfl [vmem:[#allocation1 + $0x8] sm:$0xff pattern:$0x73625140]
    %609 = vrot.lane.b32.xlu0 %v605, 1
    %v610 = vpop.permute.xlu0 %609
    %611 = vrot.lane.b32.xlu0 %v606, 1
    %v612 = vpop.permute.xlu0 %611
    %v613 = vsel %vm569, %v610, %v612
    %v614 = vsel %vm569, %v612, %v610
    %v615 = vmul.f32 %v614, %v94
    %v616 = vmul.f32 %v613, %v95
    %s617 = sld [smem:[#allocation2 + $0xc]]
    %v618 = vstv %s617
    %v619 = vmul.f32 %v618, %v615
    %v620 = vmul.f32 %v618, %v616
    %v623 = vrot.slane %v620, 6
    %v624 = vsel %vm188, %v619, %v623
    %v626 = vadd.f32 %v583, %v624
    %s627 = sld [smem:[#allocation2 + $0x27]]
    %v628 = vstv %s627
    %v629 = vmul.f32 %v628, %v615
    %v630 = vmul.f32 %v628, %v616
    %v633 = vrot.slane %v630, 6
    %v634 = vsel %vm188, %v629, %v633
    %v636 = vadd.f32 %v593, %v634
    %s637 = sld [smem:[#allocation2 + $0x42]]
    %v638 = vstv %s637
    %v639 = vmul.f32 %v638, %v615
    %v640 = vmul.f32 %v638, %v616
    %v643 = vrot.slane %v640, 6
    %v644 = vsel %vm188, %v639, %v643
    %v646 = vadd.f32 %v603, %v644
    %647 = vst [vmem:[#allocation1] ss:$4 sm:$0xff] %v130
    %v648 = vld.sshfl [vmem:[#allocation1] sm:$0xff pattern:$0x73625140]
    %v649 = vld.sshfl [vmem:[#allocation1 + $0x8] sm:$0xff pattern:$0x73625140]
    %652 = vrot.lane.b32.xlu0 %v648, 1
    %v653 = vpop.permute.xlu0 %652
    %654 = vrot.lane.b32.xlu0 %v649, 1
    %v655 = vpop.permute.xlu0 %654
    %v656 = vsel %vm569, %v653, %v655
    %v657 = vsel %vm569, %v655, %v653
    %v658 = vmul.f32 %v657, %v94
    %v659 = vmul.f32 %v656, %v95
    %s660 = sld [smem:[#allocation2 + $0x15]]
    %v661 = vstv %s660
    %v662 = vmul.f32 %v661, %v658
    %v663 = vmul.f32 %v661, %v659
    %v666 = vrot.slane %v663, 6
    %v667 = vsel %vm188, %v662, %v666
    %v669 = vadd.f32 %v626, %v667
    %s670 = sld [smem:[#allocation2 + $0x30]]
    %v671 = vstv %s670
    %v672 = vmul.f32 %v671, %v658
    %v673 = vmul.f32 %v671, %v659
    %v676 = vrot.slane %v673, 6
    %v677 = vsel %vm188, %v672, %v676
    %v679 = vadd.f32 %v636, %v677
    %s680 = sld [smem:[#allocation2 + $0x4b]]
    %v681 = vstv %s680
    %v682 = vmul.f32 %v681, %v658
    %v683 = vmul.f32 %v681, %v659
    %v686 = vrot.slane %v683, 6
    %v687 = vsel %vm188, %v682, %v686
    %v689 = vadd.f32 %v646, %v687
    %690 = vst [vmem:[#allocation1] ss:$4 sm:$0xff] %v126
    %v691 = vld.sshfl [vmem:[#allocation1] sm:$0xff pattern:$0x73625140]
    %v692 = vld.sshfl [vmem:[#allocation1 + $0x8] sm:$0xff pattern:$0x73625140]
    %695 = vrot.lane.b32.xlu0 %v691, 127
    %v696 = vpop.permute.xlu0 %695
    %697 = vrot.lane.b32.xlu0 %v692, 127
    %v698 = vpop.permute.xlu0 %697
    %vm699 = vcmp.lt.s32.totalorder %v175, 127
    %v700 = vsel %vm699, %v696, %v698
    %v701 = vsel %vm699, %v698, %v696
    %v702 = vmul.f32 %v700, %v101
    %v703 = vmul.f32 %v701, %v102
    %s704 = sld [smem:[#allocation2 + $0x5]]
    %v705 = vstv %s704
    %v706 = vmul.f32 %v705, %v702
    %v707 = vmul.f32 %v705, %v703
    %v710 = vrot.slane %v707, 6
    %v711 = vsel %vm188, %v706, %v710
    %v713 = vadd.f32 %v669, %v711
    %s714 = sld [smem:[#allocation2 + $0x20]]
    %v715 = vstv %s714
    %v716 = vmul.f32 %v715, %v702
    %v717 = vmul.f32 %v715, %v703
    %v720 = vrot.slane %v717, 6
    %v721 = vsel %vm188, %v716, %v720
    %v723 = vadd.f32 %v679, %v721
    %s724 = sld [smem:[#allocation2 + $0x3b]]
    %v725 = vstv %s724
    %v726 = vmul.f32 %v725, %v702
    %v727 = vmul.f32 %v725, %v703
    %v730 = vrot.slane %v727, 6
    %v731 = vsel %vm188, %v726, %v730
    %v733 = vadd.f32 %v689, %v731
    %734 = vst [vmem:[#allocation1] ss:$4 sm:$0xff] %v128
    %v735 = vld.sshfl [vmem:[#allocation1] sm:$0xff pattern:$0x73625140]
    %v736 = vld.sshfl [vmem:[#allocation1 + $0x8] sm:$0xff pattern:$0x73625140]
    %739 = vrot.lane.b32.xlu0 %v735, 127
    %v740 = vpop.permute.xlu0 %739
    %741 = vrot.lane.b32.xlu0 %v736, 127
    %v742 = vpop.permute.xlu0 %741
    %v743 = vsel %vm699, %v740, %v742
    %v744 = vsel %vm699, %v742, %v740
    %v745 = vmul.f32 %v743, %v101
    %v746 = vmul.f32 %v744, %v102
    %s747 = sld [smem:[#allocation2 + $0xe]]
    %v748 = vstv %s747
    %v749 = vmul.f32 %v748, %v745
    %v750 = vmul.f32 %v748, %v746
    %v753 = vrot.slane %v750, 6
    %v754 = vsel %vm188, %v749, %v753
    %v756 = vadd.f32 %v713, %v754
    %s757 = sld [smem:[#allocation2 + $0x29]]
    %v758 = vstv %s757
    %v759 = vmul.f32 %v758, %v745
    %v760 = vmul.f32 %v758, %v746
    %v763 = vrot.slane %v760, 6
    %v764 = vsel %vm188, %v759, %v763
    %v766 = vadd.f32 %v723, %v764
    %s767 = sld [smem:[#allocation2 + $0x44]]
    %v768 = vstv %s767
    %v769 = vmul.f32 %v768, %v745
    %v770 = vmul.f32 %v768, %v746
    %v773 = vrot.slane %v770, 6
    %v774 = vsel %vm188, %v769, %v773
    %v776 = vadd.f32 %v733, %v774
    %777 = vst [vmem:[#allocation1] ss:$4 sm:$0xff] %v130
    %v778 = vld.sshfl [vmem:[#allocation1] sm:$0xff pattern:$0x73625140]
    %v779 = vld.sshfl [vmem:[#allocation1 + $0x8] sm:$0xff pattern:$0x73625140]
    %782 = vrot.lane.b32.xlu0 %v778, 127
    %v783 = vpop.permute.xlu0 %782
    %784 = vrot.lane.b32.xlu0 %v779, 127
    %v785 = vpop.permute.xlu0 %784
    %v786 = vsel %vm699, %v783, %v785
    %v787 = vsel %vm699, %v785, %v783
    %v788 = vmul.f32 %v786, %v101
    %v789 = vmul.f32 %v787, %v102
    %s790 = sld [smem:[#allocation2 + $0x17]]
    %v791 = vstv %s790
    %v792 = vmul.f32 %v791, %v788
    %v793 = vmul.f32 %v791, %v789
    %v796 = vrot.slane %v793, 6
    %v797 = vsel %vm188, %v792, %v796
    %v799 = vadd.f32 %v756, %v797
    %s800 = sld [smem:[#allocation2 + $0x32]]
    %v801 = vstv %s800
    %v802 = vmul.f32 %v801, %v788
    %v803 = vmul.f32 %v801, %v789
    %v806 = vrot.slane %v803, 6
    %v807 = vsel %vm188, %v802, %v806
    %v809 = vadd.f32 %v766, %v807
    %s810 = sld [smem:[#allocation2 + $0x4d]]
    %v811 = vstv %s810
    %v812 = vmul.f32 %v811, %v788
    %v813 = vmul.f32 %v811, %v789
    %v816 = vrot.slane %v813, 6
    %v817 = vsel %vm188, %v812, %v816
    %v819 = vadd.f32 %v776, %v817
    %820 = vst [vmem:[#allocation1] ss:$4 sm:$0xff] %v126
    %v821 = vld.sshfl [vmem:[#allocation1] sm:$0xff pattern:$0x73625140]
    %v822 = vld.sshfl [vmem:[#allocation1 + $0x8] sm:$0xff pattern:$0x73625140]
    %825 = vrot.lane.b32.xlu0 %v821, 113
    %v826 = vpop.permute.xlu0 %825
    %827 = vrot.lane.b32.xlu0 %v822, 113
    %v828 = vpop.permute.xlu0 %827
    %vm829 = vcmp.lt.s32.totalorder %v175, 113
    %v830 = vsel %vm829, %v826, %v828
    %v831 = vsel %vm829, %v828, %v826
    %v832 = vmul.f32 %v830, %v108
    %v833 = vmul.f32 %v831, %v109
    %s834 = sld [smem:[#allocation2 + $0x6]]
    %v835 = vstv %s834
    %v836 = vmul.f32 %v835, %v832
    %v837 = vmul.f32 %v835, %v833
    %v840 = vrot.slane %v837, 6
    %v841 = vsel %vm188, %v836, %v840
    %v843 = vadd.f32 %v799, %v841
    %s844 = sld [smem:[#allocation2 + $0x21]]
    %v845 = vstv %s844
    %v846 = vmul.f32 %v845, %v832
    %v847 = vmul.f32 %v845, %v833
    %v850 = vrot.slane %v847, 6
    %v851 = vsel %vm188, %v846, %v850
    %v853 = vadd.f32 %v809, %v851
    %s854 = sld [smem:[#allocation2 + $0x3c]]
    %v855 = vstv %s854
    %v856 = vmul.f32 %v855, %v832
    %v857 = vmul.f32 %v855, %v833
    %v860 = vrot.slane %v857, 6
    %v861 = vsel %vm188, %v856, %v860
    %v863 = vadd.f32 %v819, %v861
    %864 = vst [vmem:[#allocation1] ss:$4 sm:$0xff] %v128
    %v865 = vld.sshfl [vmem:[#allocation1] sm:$0xff pattern:$0x73625140]
    %v866 = vld.sshfl [vmem:[#allocation1 + $0x8] sm:$0xff pattern:$0x73625140]
    %869 = vrot.lane.b32.xlu0 %v865, 113
    %v870 = vpop.permute.xlu0 %869
    %871 = vrot.lane.b32.xlu0 %v866, 113
    %v872 = vpop.permute.xlu0 %871
    %v873 = vsel %vm829, %v870, %v872
    %v874 = vsel %vm829, %v872, %v870
    %v875 = vmul.f32 %v873, %v108
    %v876 = vmul.f32 %v874, %v109
    %s877 = sld [smem:[#allocation2 + $0xf]]
    %v878 = vstv %s877
    %v879 = vmul.f32 %v878, %v875
    %v880 = vmul.f32 %v878, %v876
    %v883 = vrot.slane %v880, 6
    %v884 = vsel %vm188, %v879, %v883
    %v886 = vadd.f32 %v843, %v884
    %s887 = sld [smem:[#allocation2 + $0x2a]]
    %v888 = vstv %s887
    %v889 = vmul.f32 %v888, %v875
    %v890 = vmul.f32 %v888, %v876
    %v893 = vrot.slane %v890, 6
    %v894 = vsel %vm188, %v889, %v893
    %v896 = vadd.f32 %v853, %v894
    %s897 = sld [smem:[#allocation2 + $0x45]]
    %v898 = vstv %s897
    %v899 = vmul.f32 %v898, %v875
    %v900 = vmul.f32 %v898, %v876
    %v903 = vrot.slane %v900, 6
    %v904 = vsel %vm188, %v899, %v903
    %v906 = vadd.f32 %v863, %v904
    %907 = vst [vmem:[#allocation1] ss:$4 sm:$0xff] %v130
    %v908 = vld.sshfl [vmem:[#allocation1] sm:$0xff pattern:$0x73625140]
    %v909 = vld.sshfl [vmem:[#allocation1 + $0x8] sm:$0xff pattern:$0x73625140]
    %912 = vrot.lane.b32.xlu0 %v908, 113
    %v913 = vpop.permute.xlu0 %912
    %914 = vrot.lane.b32.xlu0 %v909, 113
    %v915 = vpop.permute.xlu0 %914
    %v916 = vsel %vm829, %v913, %v915
    %v917 = vsel %vm829, %v915, %v913
    %v918 = vmul.f32 %v916, %v108
    %v919 = vmul.f32 %v917, %v109
    %s920 = sld [smem:[#allocation2 + $0x18]]
    %v921 = vstv %s920
    %v922 = vmul.f32 %v921, %v918
    %v923 = vmul.f32 %v921, %v919
    %v926 = vrot.slane %v923, 6
    %v927 = vsel %vm188, %v922, %v926
    %v929 = vadd.f32 %v886, %v927
    %s930 = sld [smem:[#allocation2 + $0x33]]
    %v931 = vstv %s930
    %v932 = vmul.f32 %v931, %v918
    %v933 = vmul.f32 %v931, %v919
    %v936 = vrot.slane %v933, 6
    %v937 = vsel %vm188, %v932, %v936
    %v939 = vadd.f32 %v896, %v937
    %s940 = sld [smem:[#allocation2 + $0x4e]]
    %v941 = vstv %s940
    %v942 = vmul.f32 %v941, %v918
    %v943 = vmul.f32 %v941, %v919
    %v946 = vrot.slane %v943, 6
    %v947 = vsel %vm188, %v942, %v946
    %v949 = vadd.f32 %v906, %v947
    %950 = vst [vmem:[#allocation1] ss:$4 sm:$0xff] %v126
    %v951 = vld.sshfl [vmem:[#allocation1] sm:$0xff pattern:$0x73625140]
    %v952 = vld.sshfl [vmem:[#allocation1 + $0x8] sm:$0xff pattern:$0x73625140]
    %955 = vrot.lane.b32.xlu0 %v951, 112
    %v956 = vpop.permute.xlu0 %955
    %957 = vrot.lane.b32.xlu0 %v952, 112
    %v958 = vpop.permute.xlu0 %957
    %vm959 = vcmp.lt.s32.totalorder %v175, 112
    %v960 = vsel %vm959, %v956, %v958
    %v961 = vsel %vm959, %v958, %v956
    %v962 = vmul.f32 %v960, %v115
    %v963 = vmul.f32 %v961, %v116
    %s964 = sld [smem:[#allocation2 + $0x7]]
    %v965 = vstv %s964
    %v966 = vmul.f32 %v965, %v962
    %v967 = vmul.f32 %v965, %v963
    %v970 = vrot.slane %v967, 6
    %v971 = vsel %vm188, %v966, %v970
    %v973 = vadd.f32 %v929, %v971
    %s974 = sld [smem:[#allocation2 + $0x22]]
    %v975 = vstv %s974
    %v976 = vmul.f32 %v975, %v962
    %v977 = vmul.f32 %v975, %v963
    %v980 = vrot.slane %v977, 6
    %v981 = vsel %vm188, %v976, %v980
    %v983 = vadd.f32 %v939, %v981
    %s984 = sld [smem:[#allocation2 + $0x3d]]
    %v985 = vstv %s984
    %v986 = vmul.f32 %v985, %v962
    %v987 = vmul.f32 %v985, %v963
    %v990 = vrot.slane %v987, 6
    %v991 = vsel %vm188, %v986, %v990
    %v993 = vadd.f32 %v949, %v991
    %994 = vst [vmem:[#allocation1] ss:$4 sm:$0xff] %v128
    %v995 = vld.sshfl [vmem:[#allocation1] sm:$0xff pattern:$0x73625140]
    %v996 = vld.sshfl [vmem:[#allocation1 + $0x8] sm:$0xff pattern:$0x73625140]
    %999 = vrot.lane.b32.xlu0 %v995, 112
    %v1000 = vpop.permute.xlu0 %999
    %1001 = vrot.lane.b32.xlu0 %v996, 112
    %v1002 = vpop.permute.xlu0 %1001
    %v1003 = vsel %vm959, %v1000, %v1002
    %v1004 = vsel %vm959, %v1002, %v1000
    %v1005 = vmul.f32 %v1003, %v115
    %v1006 = vmul.f32 %v1004, %v116
    %s1007 = sld [smem:[#allocation2 + $0x10]]
    %v1008 = vstv %s1007
    %v1009 = vmul.f32 %v1008, %v1005
    %v1010 = vmul.f32 %v1008, %v1006
    %v1013 = vrot.slane %v1010, 6
    %v1014 = vsel %vm188, %v1009, %v1013
    %v1016 = vadd.f32 %v973, %v1014
    %s1017 = sld [smem:[#allocation2 + $0x2b]]
    %v1018 = vstv %s1017
    %v1019 = vmul.f32 %v1018, %v1005
    %v1020 = vmul.f32 %v1018, %v1006
    %v1023 = vrot.slane %v1020, 6
    %v1024 = vsel %vm188, %v1019, %v1023
    %v1026 = vadd.f32 %v983, %v1024
    %s1027 = sld [smem:[#allocation2 + $0x46]]
    %v1028 = vstv %s1027
    %v1029 = vmul.f32 %v1028, %v1005
    %v1030 = vmul.f32 %v1028, %v1006
    %v1033 = vrot.slane %v1030, 6
    %v1034 = vsel %vm188, %v1029, %v1033
    %v1036 = vadd.f32 %v993, %v1034
    %1037 = vst [vmem:[#allocation1] ss:$4 sm:$0xff] %v130
    %v1038 = vld.sshfl [vmem:[#allocation1] sm:$0xff pattern:$0x73625140]
    %v1039 = vld.sshfl [vmem:[#allocation1 + $0x8] sm:$0xff pattern:$0x73625140]
    %1042 = vrot.lane.b32.xlu0 %v1038, 112
    %v1043 = vpop.permute.xlu0 %1042
    %1044 = vrot.lane.b32.xlu0 %v1039, 112
    %v1045 = vpop.permute.xlu0 %1044
    %v1046 = vsel %vm959, %v1043, %v1045
    %v1047 = vsel %vm959, %v1045, %v1043
    %v1048 = vmul.f32 %v1046, %v115
    %v1049 = vmul.f32 %v1047, %v116
    %s1050 = sld [smem:[#allocation2 + $0x19]]
    %v1051 = vstv %s1050
    %v1052 = vmul.f32 %v1051, %v1048
    %v1053 = vmul.f32 %v1051, %v1049
    %v1056 = vrot.slane %v1053, 6
    %v1057 = vsel %vm188, %v1052, %v1056
    %v1059 = vadd.f32 %v1016, %v1057
    %s1060 = sld [smem:[#allocation2 + $0x34]]
    %v1061 = vstv %s1060
    %v1062 = vmul.f32 %v1061, %v1048
    %v1063 = vmul.f32 %v1061, %v1049
    %v1066 = vrot.slane %v1063, 6
    %v1067 = vsel %vm188, %v1062, %v1066
    %v1069 = vadd.f32 %v1026, %v1067
    %s1070 = sld [smem:[#allocation2 + $0x4f]]
    %v1071 = vstv %s1070
    %v1072 = vmul.f32 %v1071, %v1048
    %v1073 = vmul.f32 %v1071, %v1049
    %v1076 = vrot.slane %v1073, 6
    %v1077 = vsel %vm188, %v1072, %v1076
    %v1079 = vadd.f32 %v1036, %v1077
    %1080 = vst [vmem:[#allocation1] ss:$4 sm:$0xff] %v126
    %v1081 = vld.sshfl [vmem:[#allocation1] sm:$0xff pattern:$0x73625140]
    %v1082 = vld.sshfl [vmem:[#allocation1 + $0x8] sm:$0xff pattern:$0x73625140]
    %1085 = vrot.lane.b32.xlu0 %v1081, 111
    %v1086 = vpop.permute.xlu0 %1085
    %1087 = vrot.lane.b32.xlu0 %v1082, 111
    %v1088 = vpop.permute.xlu0 %1087
    %vm1089 = vcmp.lt.s32.totalorder %v175, 111
    %v1090 = vsel %vm1089, %v1086, %v1088
    %v1091 = vsel %vm1089, %v1088, %v1086
    %v1092 = vmul.f32 %v1090, %v122
    %v1093 = vmul.f32 %v1091, %v123
    %s1094 = sld [smem:[#allocation2 + $0x8]]
    %v1095 = vstv %s1094
    %v1096 = vmul.f32 %v1095, %v1092
    %v1097 = vmul.f32 %v1095, %v1093
    %v1100 = vrot.slane %v1097, 6
    %v1101 = vsel %vm188, %v1096, %v1100
    %v1103 = vadd.f32 %v1059, %v1101
    %s1104 = sld [smem:[#allocation2 + $0x23]]
    %v1105 = vstv %s1104
    %v1106 = vmul.f32 %v1105, %v1092
    %v1107 = vmul.f32 %v1105, %v1093
    %v1110 = vrot.slane %v1107, 6
    %v1111 = vsel %vm188, %v1106, %v1110
    %v1113 = vadd.f32 %v1069, %v1111
    %s1114 = sld [smem:[#allocation2 + $0x3e]]
    %v1115 = vstv %s1114
    %v1116 = vmul.f32 %v1115, %v1092
    %v1117 = vmul.f32 %v1115, %v1093
    %v1120 = vrot.slane %v1117, 6
    %v1121 = vsel %vm188, %v1116, %v1120
    %v1123 = vadd.f32 %v1079, %v1121
    %1124 = vst [vmem:[#allocation1] ss:$4 sm:$0xff] %v128
    %v1125 = vld.sshfl [vmem:[#allocation1] sm:$0xff pattern:$0x73625140]
    %v1126 = vld.sshfl [vmem:[#allocation1 + $0x8] sm:$0xff pattern:$0x73625140]
    %1129 = vrot.lane.b32.xlu0 %v1125, 111
    %v1130 = vpop.permute.xlu0 %1129
    %1131 = vrot.lane.b32.xlu0 %v1126, 111
    %v1132 = vpop.permute.xlu0 %1131
    %v1133 = vsel %vm1089, %v1130, %v1132
    %v1134 = vsel %vm1089, %v1132, %v1130
    %v1135 = vmul.f32 %v1133, %v122
    %v1136 = vmul.f32 %v1134, %v123
    %s1137 = sld [smem:[#allocation2 + $0x11]]
    %v1138 = vstv %s1137
    %v1139 = vmul.f32 %v1138, %v1135
    %v1140 = vmul.f32 %v1138, %v1136
    %v1143 = vrot.slane %v1140, 6
    %v1144 = vsel %vm188, %v1139, %v1143
    %v1146 = vadd.f32 %v1103, %v1144
    %s1147 = sld [smem:[#allocation2 + $0x2c]]
    %v1148 = vstv %s1147
    %v1149 = vmul.f32 %v1148, %v1135
    %v1150 = vmul.f32 %v1148, %v1136
    %v1153 = vrot.slane %v1150, 6
    %v1154 = vsel %vm188, %v1149, %v1153
    %v1156 = vadd.f32 %v1113, %v1154
    %s1157 = sld [smem:[#allocation2 + $0x47]]
    %v1158 = vstv %s1157
    %v1159 = vmul.f32 %v1158, %v1135
    %v1160 = vmul.f32 %v1158, %v1136
    %v1163 = vrot.slane %v1160, 6
    %v1164 = vsel %vm188, %v1159, %v1163
    %v1166 = vadd.f32 %v1123, %v1164
    %1167 = vst [vmem:[#allocation1] ss:$4 sm:$0xff] %v130
    %v1168 = vld.sshfl [vmem:[#allocation1] sm:$0xff pattern:$0x73625140]
    %v1169 = vld.sshfl [vmem:[#allocation1 + $0x8] sm:$0xff pattern:$0x73625140]
    %1172 = vrot.lane.b32.xlu0 %v1168, 111
    %v1173 = vpop.permute.xlu0 %1172
    %1174 = vrot.lane.b32.xlu0 %v1169, 111
    %v1175 = vpop.permute.xlu0 %1174
    %v1176 = vsel %vm1089, %v1173, %v1175
    %v1177 = vsel %vm1089, %v1175, %v1173
    %v1178 = vmul.f32 %v1176, %v122
    %v1179 = vmul.f32 %v1177, %v123
    %s1180 = sld [smem:[#allocation2 + $0x1a]]
    %v1181 = vstv %s1180
    %v1182 = vmul.f32 %v1181, %v1178
    %v1183 = vmul.f32 %v1181, %v1179
    %v1186 = vrot.slane %v1183, 6
    %v1187 = vsel %vm188, %v1182, %v1186
    %v1189 = vadd.f32 %v1146, %v1187
    %s1190 = sld [smem:[#allocation2 + $0x35]]
    %v1191 = vstv %s1190
    %v1192 = vmul.f32 %v1191, %v1178
    %v1193 = vmul.f32 %v1191, %v1179
    %v1196 = vrot.slane %v1193, 6
    %v1197 = vsel %vm188, %v1192, %v1196
    %v1199 = vadd.f32 %v1156, %v1197
    %s1200 = sld [smem:[#allocation2 + $0x50]]
    %v1201 = vstv %s1200
    %v1202 = vmul.f32 %v1201, %v1178
    %v1203 = vmul.f32 %v1201, %v1179
    %v1206 = vrot.slane %v1203, 6
    %v1207 = vsel %vm188, %v1202, %v1206
    %v1209 = vadd.f32 %v1166, %v1207
    %s1210 = sld [smem:[#allocation4]]
    %v1211 = vstv %s1210
    %v1212 = vadd.f32 %v1189, %v1211
    %v1213 = vmax.f32 %v1212, 0.0
    %s1214 = sld [smem:[#allocation4 + $0x1]]
    %v1215 = vstv %s1214
    %v1216 = vadd.f32 %v1199, %v1215
    %v1217 = vmax.f32 %v1216, 0.0
    %s1218 = sld [smem:[#allocation4 + $0x2]]
    %v1219 = vstv %s1218
    %v1220 = vadd.f32 %v1209, %v1219
    %v1221 = vmax.f32 %v1220, 0.0
    %s1222 = sld [smem:[#allocation6 + $0x4]]
    %v1223 = vstv %s1222
    %v1224 = vmul.f32 %v1223, %v1213
    %s1225 = sld [smem:[#allocation6 + $0x1f]]
    %v1226 = vstv %s1225
    %v1227 = vmul.f32 %v1226, %v1213
    %s1228 = sld [smem:[#allocation6 + $0x3a]]
    %v1229 = vstv %s1228
    %v1230 = vmul.f32 %v1229, %v1213
    %s1231 = sld [smem:[#allocation6 + $0xd]]
    %v1232 = vstv %s1231
    %v1233 = vmul.f32 %v1232, %v1217
    %v1234 = vadd.f32 %v1224, %v1233
    %s1235 = sld [smem:[#allocation6 + $0x28]]
    %v1236 = vstv %s1235
    %v1237 = vmul.f32 %v1236, %v1217
    %v1238 = vadd.f32 %v1227, %v1237
    %s1239 = sld [smem:[#allocation6 + $0x43]]
    %v1240 = vstv %s1239
    %v1241 = vmul.f32 %v1240, %v1217
    %v1242 = vadd.f32 %v1230, %v1241
    %s1243 = sld [smem:[#allocation6 + $0x16]]
    %v1244 = vstv %s1243
    %v1245 = vmul.f32 %v1244, %v1221
    %v1246 = vadd.f32 %v1234, %v1245
    %s1247 = sld [smem:[#allocation6 + $0x31]]
    %v1248 = vstv %s1247
    %v1249 = vmul.f32 %v1248, %v1221
    %v1250 = vadd.f32 %v1238, %v1249
    %s1251 = sld [smem:[#allocation6 + $0x4c]]
    %v1252 = vstv %s1251
    %v1253 = vmul.f32 %v1252, %v1221
    %v1254 = vadd.f32 %v1242, %v1253
    %1256 = vst [vmem:[#allocation1] ss:$4 sm:$0xff] %v1213
    %v1257 = vld.sshfl [vmem:[#allocation1] sm:$0xff pattern:$0x73625140]
    %v1258 = vld.sshfl [vmem:[#allocation1 + $0x8] sm:$0xff pattern:$0x73625140]
    %1261 = vrot.lane.b32.xlu0 %v1257, 17
    %v1262 = vpop.permute.xlu0 %1261
    %1263 = vrot.lane.b32.xlu0 %v1258, 17
    %v1264 = vpop.permute.xlu0 %1263
    %v1265 = vsel %vm176, %v1262, %v1264
    %v1266 = vsel %vm176, %v1264, %v1262
    %v1267 = vmul.f32 %v1266, %v73
    %v1268 = vmul.f32 %v1265, %v74
    %s1269 = sld [smem:[#allocation6]]
    %v1270 = vstv %s1269
    %v1271 = vmul.f32 %v1270, %v1267
    %v1272 = vmul.f32 %v1270, %v1268
    %v1275 = vrot.slane %v1272, 6
    %v1276 = vsel %vm188, %v1271, %v1275
    %v1278 = vadd.f32 %v1246, %v1276
    %s1279 = sld [smem:[#allocation6 + $0x1b]]
    %v1280 = vstv %s1279
    %v1281 = vmul.f32 %v1280, %v1267
    %v1282 = vmul.f32 %v1280, %v1268
    %v1285 = vrot.slane %v1282, 6
    %v1286 = vsel %vm188, %v1281, %v1285
    %v1288 = vadd.f32 %v1250, %v1286
    %s1289 = sld [smem:[#allocation6 + $0x36]]
    %v1290 = vstv %s1289
    %v1291 = vmul.f32 %v1290, %v1267
    %v1292 = vmul.f32 %v1290, %v1268
    %v1295 = vrot.slane %v1292, 6
    %v1296 = vsel %vm188, %v1291, %v1295
    %v1298 = vadd.f32 %v1254, %v1296
    %1300 = vst [vmem:[#allocation1] ss:$4 sm:$0xff] %v1217
    %v1301 = vld.sshfl [vmem:[#allocation1] sm:$0xff pattern:$0x73625140]
    %v1302 = vld.sshfl [vmem:[#allocation1 + $0x8] sm:$0xff pattern:$0x73625140]
    %1305 = vrot.lane.b32.xlu0 %v1301, 17
    %v1306 = vpop.permute.xlu0 %1305
    %1307 = vrot.lane.b32.xlu0 %v1302, 17
    %v1308 = vpop.permute.xlu0 %1307
    %v1309 = vsel %vm176, %v1306, %v1308
    %v1310 = vsel %vm176, %v1308, %v1306
    %v1311 = vmul.f32 %v1310, %v73
    %v1312 = vmul.f32 %v1309, %v74
    %s1313 = sld [smem:[#allocation6 + $0x9]]
    %v1314 = vstv %s1313
    %v1315 = vmul.f32 %v1314, %v1311
    %v1316 = vmul.f32 %v1314, %v1312
    %v1319 = vrot.slane %v1316, 6
    %v1320 = vsel %vm188, %v1315, %v1319
    %v1322 = vadd.f32 %v1278, %v1320
    %s1323 = sld [smem:[#allocation6 + $0x24]]
    %v1324 = vstv %s1323
    %v1325 = vmul.f32 %v1324, %v1311
    %v1326 = vmul.f32 %v1324, %v1312
    %v1329 = vrot.slane %v1326, 6
    %v1330 = vsel %vm188, %v1325, %v1329
    %v1332 = vadd.f32 %v1288, %v1330
    %s1333 = sld [smem:[#allocation6 + $0x3f]]
    %v1334 = vstv %s1333
    %v1335 = vmul.f32 %v1334, %v1311
    %v1336 = vmul.f32 %v1334, %v1312
    %v1339 = vrot.slane %v1336, 6
    %v1340 = vsel %vm188, %v1335, %v1339
    %v1342 = vadd.f32 %v1298, %v1340
    %1344 = vst [vmem:[#allocation1] ss:$4 sm:$0xff] %v1221
    %v1345 = vld.sshfl [vmem:[#allocation1] sm:$0xff pattern:$0x73625140]
    %v1346 = vld.sshfl [vmem:[#allocation1 + $0x8] sm:$0xff pattern:$0x73625140]
    %1349 = vrot.lane.b32.xlu0 %v1345, 17
    %v1350 = vpop.permute.xlu0 %1349
    %1351 = vrot.lane.b32.xlu0 %v1346, 17
    %v1352 = vpop.permute.xlu0 %1351
    %v1353 = vsel %vm176, %v1350, %v1352
    %v1354 = vsel %vm176, %v1352, %v1350
    %v1355 = vmul.f32 %v1354, %v73
    %v1356 = vmul.f32 %v1353, %v74
    %s1357 = sld [smem:[#allocation6 + $0x12]]
    %v1358 = vstv %s1357
    %v1359 = vmul.f32 %v1358, %v1355
    %v1360 = vmul.f32 %v1358, %v1356
    %v1363 = vrot.slane %v1360, 6
    %v1364 = vsel %vm188, %v1359, %v1363
    %v1366 = vadd.f32 %v1322, %v1364
    %s1367 = sld [smem:[#allocation6 + $0x2d]]
    %v1368 = vstv %s1367
    %v1369 = vmul.f32 %v1368, %v1355
    %v1370 = vmul.f32 %v1368, %v1356
    %v1373 = vrot.slane %v1370, 6
    %v1374 = vsel %vm188, %v1369, %v1373
    %v1376 = vadd.f32 %v1332, %v1374
    %s1377 = sld [smem:[#allocation6 + $0x48]]
    %v1378 = vstv %s1377
    %v1379 = vmul.f32 %v1378, %v1355
    %v1380 = vmul.f32 %v1378, %v1356
    %v1383 = vrot.slane %v1380, 6
    %v1384 = vsel %vm188, %v1379, %v1383
    %v1386 = vadd.f32 %v1342, %v1384
    %1387 = vst [vmem:[#allocation1] ss:$4 sm:$0xff] %v1213
    %v1388 = vld.sshfl [vmem:[#allocation1] sm:$0xff pattern:$0x73625140]
    %v1389 = vld.sshfl [vmem:[#allocation1 + $0x8] sm:$0xff pattern:$0x73625140]
    %1392 = vrot.lane.b32.xlu0 %v1388, 16
    %v1393 = vpop.permute.xlu0 %1392
    %1394 = vrot.lane.b32.xlu0 %v1389, 16
    %v1395 = vpop.permute.xlu0 %1394
    %v1396 = vsel %vm309, %v1393, %v1395
    %v1397 = vsel %vm309, %v1395, %v1393
    %v1398 = vmul.f32 %v1397, %v80
    %v1399 = vmul.f32 %v1396, %v81
    %s1400 = sld [smem:[#allocation6 + $0x1]]
    %v1401 = vstv %s1400
    %v1402 = vmul.f32 %v1401, %v1398
    %v1403 = vmul.f32 %v1401, %v1399
    %v1406 = vrot.slane %v1403, 6
    %v1407 = vsel %vm188, %v1402, %v1406
    %v1409 = vadd.f32 %v1366, %v1407
    %s1410 = sld [smem:[#allocation6 + $0x1c]]
    %v1411 = vstv %s1410
    %v1412 = vmul.f32 %v1411, %v1398
    %v1413 = vmul.f32 %v1411, %v1399
    %v1416 = vrot.slane %v1413, 6
    %v1417 = vsel %vm188, %v1412, %v1416
    %v1419 = vadd.f32 %v1376, %v1417
    %s1420 = sld [smem:[#allocation6 + $0x37]]
    %v1421 = vstv %s1420
    %v1422 = vmul.f32 %v1421, %v1398
    %v1423 = vmul.f32 %v1421, %v1399
    %v1426 = vrot.slane %v1423, 6
    %v1427 = vsel %vm188, %v1422, %v1426
    %v1429 = vadd.f32 %v1386, %v1427
    %1430 = vst [vmem:[#allocation1] ss:$4 sm:$0xff] %v1217
    %v1431 = vld.sshfl [vmem:[#allocation1] sm:$0xff pattern:$0x73625140]
    %v1432 = vld.sshfl [vmem:[#allocation1 + $0x8] sm:$0xff pattern:$0x73625140]
    %1435 = vrot.lane.b32.xlu0 %v1431, 16
    %v1436 = vpop.permute.xlu0 %1435
    %1437 = vrot.lane.b32.xlu0 %v1432, 16
    %v1438 = vpop.permute.xlu0 %1437
    %v1439 = vsel %vm309, %v1436, %v1438
    %v1440 = vsel %vm309, %v1438, %v1436
    %v1441 = vmul.f32 %v1440, %v80
    %v1442 = vmul.f32 %v1439, %v81
    %s1443 = sld [smem:[#allocation6 + $0xa]]
    %v1444 = vstv %s1443
    %v1445 = vmul.f32 %v1444, %v1441
    %v1446 = vmul.f32 %v1444, %v1442
    %v1449 = vrot.slane %v1446, 6
    %v1450 = vsel %vm188, %v1445, %v1449
    %v1452 = vadd.f32 %v1409, %v1450
    %s1453 = sld [smem:[#allocation6 + $0x25]]
    %v1454 = vstv %s1453
    %v1455 = vmul.f32 %v1454, %v1441
    %v1456 = vmul.f32 %v1454, %v1442
    %v1459 = vrot.slane %v1456, 6
    %v1460 = vsel %vm188, %v1455, %v1459
    %v1462 = vadd.f32 %v1419, %v1460
    %s1463 = sld [smem:[#allocation6 + $0x40]]
    %v1464 = vstv %s1463
    %v1465 = vmul.f32 %v1464, %v1441
    %v1466 = vmul.f32 %v1464, %v1442
    %v1469 = vrot.slane %v1466, 6
    %v1470 = vsel %vm188, %v1465, %v1469
    %v1472 = vadd.f32 %v1429, %v1470
    %1473 = vst [vmem:[#allocation1] ss:$4 sm:$0xff] %v1221
    %v1474 = vld.sshfl [vmem:[#allocation1] sm:$0xff pattern:$0x73625140]
    %v1475 = vld.sshfl [vmem:[#allocation1 + $0x8] sm:$0xff pattern:$0x73625140]
    %1478 = vrot.lane.b32.xlu0 %v1474, 16
    %v1479 = vpop.permute.xlu0 %1478
    %1480 = vrot.lane.b32.xlu0 %v1475, 16
    %v1481 = vpop.permute.xlu0 %1480
    %v1482 = vsel %vm309, %v1479, %v1481
    %v1483 = vsel %vm309, %v1481, %v1479
    %v1484 = vmul.f32 %v1483, %v80
    %v1485 = vmul.f32 %v1482, %v81
    %s1486 = sld [smem:[#allocation6 + $0x13]]
    %v1487 = vstv %s1486
    %v1488 = vmul.f32 %v1487, %v1484
    %v1489 = vmul.f32 %v1487, %v1485
    %v1492 = vrot.slane %v1489, 6
    %v1493 = vsel %vm188, %v1488, %v1492
    %v1495 = vadd.f32 %v1452, %v1493
    %s1496 = sld [smem:[#allocation6 + $0x2e]]
    %v1497 = vstv %s1496
    %v1498 = vmul.f32 %v1497, %v1484
    %v1499 = vmul.f32 %v1497, %v1485
    %v1502 = vrot.slane %v1499, 6
    %v1503 = vsel %vm188, %v1498, %v1502
    %v1505 = vadd.f32 %v1462, %v1503
    %s1506 = sld [smem:[#allocation6 + $0x49]]
    %v1507 = vstv %s1506
    %v1508 = vmul.f32 %v1507, %v1484
    %v1509 = vmul.f32 %v1507, %v1485
    %v1512 = vrot.slane %v1509, 6
    %v1513 = vsel %vm188, %v1508, %v1512
    %v1515 = vadd.f32 %v1472, %v1513
    %1516 = vst [vmem:[#allocation1] ss:$4 sm:$0xff] %v1213
    %v1517 = vld.sshfl [vmem:[#allocation1] sm:$0xff pattern:$0x73625140]
    %v1518 = vld.sshfl [vmem:[#allocation1 + $0x8] sm:$0xff pattern:$0x73625140]
    %1521 = vrot.lane.b32.xlu0 %v1517, 15
    %v1522 = vpop.permute.xlu0 %1521
    %1523 = vrot.lane.b32.xlu0 %v1518, 15
    %v1524 = vpop.permute.xlu0 %1523
    %v1525 = vsel %vm439, %v1522, %v1524
    %v1526 = vsel %vm439, %v1524, %v1522
    %v1527 = vmul.f32 %v1526, %v87
    %v1528 = vmul.f32 %v1525, %v88
    %s1529 = sld [smem:[#allocation6 + $0x2]]
    %v1530 = vstv %s1529
    %v1531 = vmul.f32 %v1530, %v1527
    %v1532 = vmul.f32 %v1530, %v1528
    %v1535 = vrot.slane %v1532, 6
    %v1536 = vsel %vm188, %v1531, %v1535
    %v1538 = vadd.f32 %v1495, %v1536
    %s1539 = sld [smem:[#allocation6 + $0x1d]]
    %v1540 = vstv %s1539
    %v1541 = vmul.f32 %v1540, %v1527
    %v1542 = vmul.f32 %v1540, %v1528
    %v1545 = vrot.slane %v1542, 6
    %v1546 = vsel %vm188, %v1541, %v1545
    %v1548 = vadd.f32 %v1505, %v1546
    %s1549 = sld [smem:[#allocation6 + $0x38]]
    %v1550 = vstv %s1549
    %v1551 = vmul.f32 %v1550, %v1527
    %v1552 = vmul.f32 %v1550, %v1528
    %v1555 = vrot.slane %v1552, 6
    %v1556 = vsel %vm188, %v1551, %v1555
    %v1558 = vadd.f32 %v1515, %v1556
    %1559 = vst [vmem:[#allocation1] ss:$4 sm:$0xff] %v1217
    %v1560 = vld.sshfl [vmem:[#allocation1] sm:$0xff pattern:$0x73625140]
    %v1561 = vld.sshfl [vmem:[#allocation1 + $0x8] sm:$0xff pattern:$0x73625140]
    %1564 = vrot.lane.b32.xlu0 %v1560, 15
    %v1565 = vpop.permute.xlu0 %1564
    %1566 = vrot.lane.b32.xlu0 %v1561, 15
    %v1567 = vpop.permute.xlu0 %1566
    %v1568 = vsel %vm439, %v1565, %v1567
    %v1569 = vsel %vm439, %v1567, %v1565
    %v1570 = vmul.f32 %v1569, %v87
    %v1571 = vmul.f32 %v1568, %v88
    %s1572 = sld [smem:[#allocation6 + $0xb]]
    %v1573 = vstv %s1572
    %v1574 = vmul.f32 %v1573, %v1570
    %v1575 = vmul.f32 %v1573, %v1571
    %v1578 = vrot.slane %v1575, 6
    %v1579 = vsel %vm188, %v1574, %v1578
    %v1581 = vadd.f32 %v1538, %v1579
    %s1582 = sld [smem:[#allocation6 + $0x26]]
    %v1583 = vstv %s1582
    %v1584 = vmul.f32 %v1583, %v1570
    %v1585 = vmul.f32 %v1583, %v1571
    %v1588 = vrot.slane %v1585, 6
    %v1589 = vsel %vm188, %v1584, %v1588
    %v1591 = vadd.f32 %v1548, %v1589
    %s1592 = sld [smem:[#allocation6 + $0x41]]
    %v1593 = vstv %s1592
    %v1594 = vmul.f32 %v1593, %v1570
    %v1595 = vmul.f32 %v1593, %v1571
    %v1598 = vrot.slane %v1595, 6
    %v1599 = vsel %vm188, %v1594, %v1598
    %v1601 = vadd.f32 %v1558, %v1599
    %1602 = vst [vmem:[#allocation1] ss:$4 sm:$0xff] %v1221
    %v1603 = vld.sshfl [vmem:[#allocation1] sm:$0xff pattern:$0x73625140]
    %v1604 = vld.sshfl [vmem:[#allocation1 + $0x8] sm:$0xff pattern:$0x73625140]
    %1607 = vrot.lane.b32.xlu0 %v1603, 15
    %v1608 = vpop.permute.xlu0 %1607
    %1609 = vrot.lane.b32.xlu0 %v1604, 15
    %v1610 = vpop.permute.xlu0 %1609
    %v1611 = vsel %vm439, %v1608, %v1610
    %v1612 = vsel %vm439, %v1610, %v1608
    %v1613 = vmul.f32 %v1612, %v87
    %v1614 = vmul.f32 %v1611, %v88
    %s1615 = sld [smem:[#allocation6 + $0x14]]
    %v1616 = vstv %s1615
    %v1617 = vmul.f32 %v1616, %v1613
    %v1618 = vmul.f32 %v1616, %v1614
    %v1621 = vrot.slane %v1618, 6
    %v1622 = vsel %vm188, %v1617, %v1621
    %v1624 = vadd.f32 %v1581, %v1622
    %s1625 = sld [smem:[#allocation6 + $0x2f]]
    %v1626 = vstv %s1625
    %v1627 = vmul.f32 %v1626, %v1613
    %v1628 = vmul.f32 %v1626, %v1614
    %v1631 = vrot.slane %v1628, 6
    %v1632 = vsel %vm188, %v1627, %v1631
    %v1634 = vadd.f32 %v1591, %v1632
    %s1635 = sld [smem:[#allocation6 + $0x4a]]
    %v1636 = vstv %s1635
    %v1637 = vmul.f32 %v1636, %v1613
    %v1638 = vmul.f32 %v1636, %v1614
    %v1641 = vrot.slane %v1638, 6
    %v1642 = vsel %vm188, %v1637, %v1641
    %v1644 = vadd.f32 %v1601, %v1642
    %1645 = vst [vmem:[#allocation1] ss:$4 sm:$0xff] %v1213
    %v1646 = vld.sshfl [vmem:[#allocation1] sm:$0xff pattern:$0x73625140]
    %v1647 = vld.sshfl [vmem:[#allocation1 + $0x8] sm:$0xff pattern:$0x73625140]
    %1650 = vrot.lane.b32.xlu0 %v1646, 1
    %v1651 = vpop.permute.xlu0 %1650
    %1652 = vrot.lane.b32.xlu0 %v1647, 1
    %v1653 = vpop.permute.xlu0 %1652
    %v1654 = vsel %vm569, %v1651, %v1653
    %v1655 = vsel %vm569, %v1653, %v1651
    %v1656 = vmul.f32 %v1655, %v94
    %v1657 = vmul.f32 %v1654, %v95
    %s1658 = sld [smem:[#allocation6 + $0x3]]
    %v1659 = vstv %s1658
    %v1660 = vmul.f32 %v1659, %v1656
    %v1661 = vmul.f32 %v1659, %v1657
    %v1664 = vrot.slane %v1661, 6
    %v1665 = vsel %vm188, %v1660, %v1664
    %v1667 = vadd.f32 %v1624, %v1665
    %s1668 = sld [smem:[#allocation6 + $0x1e]]
    %v1669 = vstv %s1668
    %v1670 = vmul.f32 %v1669, %v1656
    %v1671 = vmul.f32 %v1669, %v1657
    %v1674 = vrot.slane %v1671, 6
    %v1675 = vsel %vm188, %v1670, %v1674
    %v1677 = vadd.f32 %v1634, %v1675
    %s1678 = sld [smem:[#allocation6 + $0x39]]
    %v1679 = vstv %s1678
    %v1680 = vmul.f32 %v1679, %v1656
    %v1681 = vmul.f32 %v1679, %v1657
    %v1684 = vrot.slane %v1681, 6
    %v1685 = vsel %vm188, %v1680, %v1684
    %v1687 = vadd.f32 %v1644, %v1685
    %1688 = vst [vmem:[#allocation1] ss:$4 sm:$0xff] %v1217
    %v1689 = vld.sshfl [vmem:[#allocation1] sm:$0xff pattern:$0x73625140]
    %v1690 = vld.sshfl [vmem:[#allocation1 + $0x8] sm:$0xff pattern:$0x73625140]
    %1693 = vrot.lane.b32.xlu0 %v1689, 1
    %v1694 = vpop.permute.xlu0 %1693
    %1695 = vrot.lane.b32.xlu0 %v1690, 1
    %v1696 = vpop.permute.xlu0 %1695
    %v1697 = vsel %vm569, %v1694, %v1696
    %v1698 = vsel %vm569, %v1696, %v1694
    %v1699 = vmul.f32 %v1698, %v94
    %v1700 = vmul.f32 %v1697, %v95
    %s1701 = sld [smem:[#allocation6 + $0xc]]
    %v1702 = vstv %s1701
    %v1703 = vmul.f32 %v1702, %v1699
    %v1704 = vmul.f32 %v1702, %v1700
    %v1707 = vrot.slane %v1704, 6
    %v1708 = vsel %vm188, %v1703, %v1707
    %v1710 = vadd.f32 %v1667, %v1708
    %s1711 = sld [smem:[#allocation6 + $0x27]]
    %v1712 = vstv %s1711
    %v1713 = vmul.f32 %v1712, %v1699
    %v1714 = vmul.f32 %v1712, %v1700
    %v1717 = vrot.slane %v1714, 6
    %v1718 = vsel %vm188, %v1713, %v1717
    %v1720 = vadd.f32 %v1677, %v1718
    %s1721 = sld [smem:[#allocation6 + $0x42]]
    %v1722 = vstv %s1721
    %v1723 = vmul.f32 %v1722, %v1699
    %v1724 = vmul.f32 %v1722, %v1700
    %v1727 = vrot.slane %v1724, 6
    %v1728 = vsel %vm188, %v1723, %v1727
    %v1730 = vadd.f32 %v1687, %v1728
    %1731 = vst [vmem:[#allocation1] ss:$4 sm:$0xff] %v1221
    %v1732 = vld.sshfl [vmem:[#allocation1] sm:$0xff pattern:$0x73625140]
    %v1733 = vld.sshfl [vmem:[#allocation1 + $0x8] sm:$0xff pattern:$0x73625140]
    %1736 = vrot.lane.b32.xlu0 %v1732, 1
    %v1737 = vpop.permute.xlu0 %1736
    %1738 = vrot.lane.b32.xlu0 %v1733, 1
    %v1739 = vpop.permute.xlu0 %1738
    %v1740 = vsel %vm569, %v1737, %v1739
    %v1741 = vsel %vm569, %v1739, %v1737
    %v1742 = vmul.f32 %v1741, %v94
    %v1743 = vmul.f32 %v1740, %v95
    %s1744 = sld [smem:[#allocation6 + $0x15]]
    %v1745 = vstv %s1744
    %v1746 = vmul.f32 %v1745, %v1742
    %v1747 = vmul.f32 %v1745, %v1743
    %v1750 = vrot.slane %v1747, 6
    %v1751 = vsel %vm188, %v1746, %v1750
    %v1753 = vadd.f32 %v1710, %v1751
    %s1754 = sld [smem:[#allocation6 + $0x30]]
    %v1755 = vstv %s1754
    %v1756 = vmul.f32 %v1755, %v1742
    %v1757 = vmul.f32 %v1755, %v1743
    %v1760 = vrot.slane %v1757, 6
    %v1761 = vsel %vm188, %v1756, %v1760
    %v1763 = vadd.f32 %v1720, %v1761
    %s1764 = sld [smem:[#allocation6 + $0x4b]]
    %v1765 = vstv %s1764
    %v1766 = vmul.f32 %v1765, %v1742
    %v1767 = vmul.f32 %v1765, %v1743
    %v1770 = vrot.slane %v1767, 6
    %v1771 = vsel %vm188, %v1766, %v1770
    %v1773 = vadd.f32 %v1730, %v1771
    %1774 = vst [vmem:[#allocation1] ss:$4 sm:$0xff] %v1213
    %v1775 = vld.sshfl [vmem:[#allocation1] sm:$0xff pattern:$0x73625140]
    %v1776 = vld.sshfl [vmem:[#allocation1 + $0x8] sm:$0xff pattern:$0x73625140]
    %1779 = vrot.lane.b32.xlu0 %v1775, 127
    %v1780 = vpop.permute.xlu0 %1779
    %1781 = vrot.lane.b32.xlu0 %v1776, 127
    %v1782 = vpop.permute.xlu0 %1781
    %v1783 = vsel %vm699, %v1780, %v1782
    %v1784 = vsel %vm699, %v1782, %v1780
    %v1785 = vmul.f32 %v1783, %v101
    %v1786 = vmul.f32 %v1784, %v102
    %s1787 = sld [smem:[#allocation6 + $0x5]]
    %v1788 = vstv %s1787
    %v1789 = vmul.f32 %v1788, %v1785
    %v1790 = vmul.f32 %v1788, %v1786
    %v1793 = vrot.slane %v1790, 6
    %v1794 = vsel %vm188, %v1789, %v1793
    %v1796 = vadd.f32 %v1753, %v1794
    %s1797 = sld [smem:[#allocation6 + $0x20]]
    %v1798 = vstv %s1797
    %v1799 = vmul.f32 %v1798, %v1785
    %v1800 = vmul.f32 %v1798, %v1786
    %v1803 = vrot.slane %v1800, 6
    %v1804 = vsel %vm188, %v1799, %v1803
    %v1806 = vadd.f32 %v1763, %v1804
    %s1807 = sld [smem:[#allocation6 + $0x3b]]
    %v1808 = vstv %s1807
    %v1809 = vmul.f32 %v1808, %v1785
    %v1810 = vmul.f32 %v1808, %v1786
    %v1813 = vrot.slane %v1810, 6
    %v1814 = vsel %vm188, %v1809, %v1813
    %v1816 = vadd.f32 %v1773, %v1814
    %1817 = vst [vmem:[#allocation1] ss:$4 sm:$0xff] %v1217
    %v1818 = vld.sshfl [vmem:[#allocation1] sm:$0xff pattern:$0x73625140]
    %v1819 = vld.sshfl [vmem:[#allocation1 + $0x8] sm:$0xff pattern:$0x73625140]
    %1822 = vrot.lane.b32.xlu0 %v1818, 127
    %v1823 = vpop.permute.xlu0 %1822
    %1824 = vrot.lane.b32.xlu0 %v1819, 127
    %v1825 = vpop.permute.xlu0 %1824
    %v1826 = vsel %vm699, %v1823, %v1825
    %v1827 = vsel %vm699, %v1825, %v1823
    %v1828 = vmul.f32 %v1826, %v101
    %v1829 = vmul.f32 %v1827, %v102
    %s1830 = sld [smem:[#allocation6 + $0xe]]
    %v1831 = vstv %s1830
    %v1832 = vmul.f32 %v1831, %v1828
    %v1833 = vmul.f32 %v1831, %v1829
    %v1836 = vrot.slane %v1833, 6
    %v1837 = vsel %vm188, %v1832, %v1836
    %v1839 = vadd.f32 %v1796, %v1837
    %s1840 = sld [smem:[#allocation6 + $0x29]]
    %v1841 = vstv %s1840
    %v1842 = vmul.f32 %v1841, %v1828
    %v1843 = vmul.f32 %v1841, %v1829
    %v1846 = vrot.slane %v1843, 6
    %v1847 = vsel %vm188, %v1842, %v1846
    %v1849 = vadd.f32 %v1806, %v1847
    %s1850 = sld [smem:[#allocation6 + $0x44]]
    %v1851 = vstv %s1850
    %v1852 = vmul.f32 %v1851, %v1828
    %v1853 = vmul.f32 %v1851, %v1829
    %v1856 = vrot.slane %v1853, 6
    %v1857 = vsel %vm188, %v1852, %v1856
    %v1859 = vadd.f32 %v1816, %v1857
    %1860 = vst [vmem:[#allocation1] ss:$4 sm:$0xff] %v1221
    %v1861 = vld.sshfl [vmem:[#allocation1] sm:$0xff pattern:$0x73625140]
    %v1862 = vld.sshfl [vmem:[#allocation1 + $0x8] sm:$0xff pattern:$0x73625140]
    %1865 = vrot.lane.b32.xlu0 %v1861, 127
    %v1866 = vpop.permute.xlu0 %1865
    %1867 = vrot.lane.b32.xlu0 %v1862, 127
    %v1868 = vpop.permute.xlu0 %1867
    %v1869 = vsel %vm699, %v1866, %v1868
    %v1870 = vsel %vm699, %v1868, %v1866
    %v1871 = vmul.f32 %v1869, %v101
    %v1872 = vmul.f32 %v1870, %v102
    %s1873 = sld [smem:[#allocation6 + $0x17]]
    %v1874 = vstv %s1873
    %v1875 = vmul.f32 %v1874, %v1871
    %v1876 = vmul.f32 %v1874, %v1872
    %v1879 = vrot.slane %v1876, 6
    %v1880 = vsel %vm188, %v1875, %v1879
    %v1882 = vadd.f32 %v1839, %v1880
    %s1883 = sld [smem:[#allocation6 + $0x32]]
    %v1884 = vstv %s1883
    %v1885 = vmul.f32 %v1884, %v1871
    %v1886 = vmul.f32 %v1884, %v1872
    %v1889 = vrot.slane %v1886, 6
    %v1890 = vsel %vm188, %v1885, %v1889
    %v1892 = vadd.f32 %v1849, %v1890
    %s1893 = sld [smem:[#allocation6 + $0x4d]]
    %v1894 = vstv %s1893
    %v1895 = vmul.f32 %v1894, %v1871
    %v1896 = vmul.f32 %v1894, %v1872
    %v1899 = vrot.slane %v1896, 6
    %v1900 = vsel %vm188, %v1895, %v1899
    %v1902 = vadd.f32 %v1859, %v1900
    %1903 = vst [vmem:[#allocation1] ss:$4 sm:$0xff] %v1213
    %v1904 = vld.sshfl [vmem:[#allocation1] sm:$0xff pattern:$0x73625140]
    %v1905 = vld.sshfl [vmem:[#allocation1 + $0x8] sm:$0xff pattern:$0x73625140]
    %1908 = vrot.lane.b32.xlu0 %v1904, 113
    %v1909 = vpop.permute.xlu0 %1908
    %1910 = vrot.lane.b32.xlu0 %v1905, 113
    %v1911 = vpop.permute.xlu0 %1910
    %v1912 = vsel %vm829, %v1909, %v1911
    %v1913 = vsel %vm829, %v1911, %v1909
    %v1914 = vmul.f32 %v1912, %v108
    %v1915 = vmul.f32 %v1913, %v109
    %s1916 = sld [smem:[#allocation6 + $0x6]]
    %v1917 = vstv %s1916
    %v1918 = vmul.f32 %v1917, %v1914
    %v1919 = vmul.f32 %v1917, %v1915
    %v1922 = vrot.slane %v1919, 6
    %v1923 = vsel %vm188, %v1918, %v1922
    %v1925 = vadd.f32 %v1882, %v1923
    %s1926 = sld [smem:[#allocation6 + $0x21]]
    %v1927 = vstv %s1926
    %v1928 = vmul.f32 %v1927, %v1914
    %v1929 = vmul.f32 %v1927, %v1915
    %v1932 = vrot.slane %v1929, 6
    %v1933 = vsel %vm188, %v1928, %v1932
    %v1935 = vadd.f32 %v1892, %v1933
    %s1936 = sld [smem:[#allocation6 + $0x3c]]
    %v1937 = vstv %s1936
    %v1938 = vmul.f32 %v1937, %v1914
    %v1939 = vmul.f32 %v1937, %v1915
    %v1942 = vrot.slane %v1939, 6
    %v1943 = vsel %vm188, %v1938, %v1942
    %v1945 = vadd.f32 %v1902, %v1943
    %1946 = vst [vmem:[#allocation1] ss:$4 sm:$0xff] %v1217
    %v1947 = vld.sshfl [vmem:[#allocation1] sm:$0xff pattern:$0x73625140]
    %v1948 = vld.sshfl [vmem:[#allocation1 + $0x8] sm:$0xff pattern:$0x73625140]
    %1951 = vrot.lane.b32.xlu0 %v1947, 113
    %v1952 = vpop.permute.xlu0 %1951
    %1953 = vrot.lane.b32.xlu0 %v1948, 113
    %v1954 = vpop.permute.xlu0 %1953
    %v1955 = vsel %vm829, %v1952, %v1954
    %v1956 = vsel %vm829, %v1954, %v1952
    %v1957 = vmul.f32 %v1955, %v108
    %v1958 = vmul.f32 %v1956, %v109
    %s1959 = sld [smem:[#allocation6 + $0xf]]
    %v1960 = vstv %s1959
    %v1961 = vmul.f32 %v1960, %v1957
    %v1962 = vmul.f32 %v1960, %v1958
    %v1965 = vrot.slane %v1962, 6
    %v1966 = vsel %vm188, %v1961, %v1965
    %v1968 = vadd.f32 %v1925, %v1966
    %s1969 = sld [smem:[#allocation6 + $0x2a]]
    %v1970 = vstv %s1969
    %v1971 = vmul.f32 %v1970, %v1957
    %v1972 = vmul.f32 %v1970, %v1958
    %v1975 = vrot.slane %v1972, 6
    %v1976 = vsel %vm188, %v1971, %v1975
    %v1978 = vadd.f32 %v1935, %v1976
    %s1979 = sld [smem:[#allocation6 + $0x45]]
    %v1980 = vstv %s1979
    %v1981 = vmul.f32 %v1980, %v1957
    %v1982 = vmul.f32 %v1980, %v1958
    %v1985 = vrot.slane %v1982, 6
    %v1986 = vsel %vm188, %v1981, %v1985
    %v1988 = vadd.f32 %v1945, %v1986
    %1989 = vst [vmem:[#allocation1] ss:$4 sm:$0xff] %v1221
    %v1990 = vld.sshfl [vmem:[#allocation1] sm:$0xff pattern:$0x73625140]
    %v1991 = vld.sshfl [vmem:[#allocation1 + $0x8] sm:$0xff pattern:$0x73625140]
    %1994 = vrot.lane.b32.xlu0 %v1990, 113
    %v1995 = vpop.permute.xlu0 %1994
    %1996 = vrot.lane.b32.xlu0 %v1991, 113
    %v1997 = vpop.permute.xlu0 %1996
    %v1998 = vsel %vm829, %v1995, %v1997
    %v1999 = vsel %vm829, %v1997, %v1995
    %v2000 = vmul.f32 %v1998, %v108
    %v2001 = vmul.f32 %v1999, %v109
    %s2002 = sld [smem:[#allocation6 + $0x18]]
    %v2003 = vstv %s2002
    %v2004 = vmul.f32 %v2003, %v2000
    %v2005 = vmul.f32 %v2003, %v2001
    %v2008 = vrot.slane %v2005, 6
    %v2009 = vsel %vm188, %v2004, %v2008
    %v2011 = vadd.f32 %v1968, %v2009
    %s2012 = sld [smem:[#allocation6 + $0x33]]
    %v2013 = vstv %s2012
    %v2014 = vmul.f32 %v2013, %v2000
    %v2015 = vmul.f32 %v2013, %v2001
    %v2018 = vrot.slane %v2015, 6
    %v2019 = vsel %vm188, %v2014, %v2018
    %v2021 = vadd.f32 %v1978, %v2019
    %s2022 = sld [smem:[#allocation6 + $0x4e]]
    %v2023 = vstv %s2022
    %v2024 = vmul.f32 %v2023, %v2000
    %v2025 = vmul.f32 %v2023, %v2001
    %v2028 = vrot.slane %v2025, 6
    %v2029 = vsel %vm188, %v2024, %v2028
    %v2031 = vadd.f32 %v1988, %v2029
    %2032 = vst [vmem:[#allocation1] ss:$4 sm:$0xff] %v1213
    %v2033 = vld.sshfl [vmem:[#allocation1] sm:$0xff pattern:$0x73625140]
    %v2034 = vld.sshfl [vmem:[#allocation1 + $0x8] sm:$0xff pattern:$0x73625140]
    %2037 = vrot.lane.b32.xlu0 %v2033, 112
    %v2038 = vpop.permute.xlu0 %2037
    %2039 = vrot.lane.b32.xlu0 %v2034, 112
    %v2040 = vpop.permute.xlu0 %2039
    %v2041 = vsel %vm959, %v2038, %v2040
    %v2042 = vsel %vm959, %v2040, %v2038
    %v2043 = vmul.f32 %v2041, %v115
    %v2044 = vmul.f32 %v2042, %v116
    %s2045 = sld [smem:[#allocation6 + $0x7]]
    %v2046 = vstv %s2045
    %v2047 = vmul.f32 %v2046, %v2043
    %v2048 = vmul.f32 %v2046, %v2044
    %v2051 = vrot.slane %v2048, 6
    %v2052 = vsel %vm188, %v2047, %v2051
    %v2054 = vadd.f32 %v2011, %v2052
    %s2055 = sld [smem:[#allocation6 + $0x22]]
    %v2056 = vstv %s2055
    %v2057 = vmul.f32 %v2056, %v2043
    %v2058 = vmul.f32 %v2056, %v2044
    %v2061 = vrot.slane %v2058, 6
    %v2062 = vsel %vm188, %v2057, %v2061
    %v2064 = vadd.f32 %v2021, %v2062
    %s2065 = sld [smem:[#allocation6 + $0x3d]]
    %v2066 = vstv %s2065
    %v2067 = vmul.f32 %v2066, %v2043
    %v2068 = vmul.f32 %v2066, %v2044
    %v2071 = vrot.slane %v2068, 6
    %v2072 = vsel %vm188, %v2067, %v2071
    %v2074 = vadd.f32 %v2031, %v2072
    %2075 = vst [vmem:[#allocation1] ss:$4 sm:$0xff] %v1217
    %v2076 = vld.sshfl [vmem:[#allocation1] sm:$0xff pattern:$0x73625140]
    %v2077 = vld.sshfl [vmem:[#allocation1 + $0x8] sm:$0xff pattern:$0x73625140]
    %2080 = vrot.lane.b32.xlu0 %v2076, 112
    %v2081 = vpop.permute.xlu0 %2080
    %2082 = vrot.lane.b32.xlu0 %v2077, 112
    %v2083 = vpop.permute.xlu0 %2082
    %v2084 = vsel %vm959, %v2081, %v2083
    %v2085 = vsel %vm959, %v2083, %v2081
    %v2086 = vmul.f32 %v2084, %v115
    %v2087 = vmul.f32 %v2085, %v116
    %s2088 = sld [smem:[#allocation6 + $0x10]]
    %v2089 = vstv %s2088
    %v2090 = vmul.f32 %v2089, %v2086
    %v2091 = vmul.f32 %v2089, %v2087
    %v2094 = vrot.slane %v2091, 6
    %v2095 = vsel %vm188, %v2090, %v2094
    %v2097 = vadd.f32 %v2054, %v2095
    %s2098 = sld [smem:[#allocation6 + $0x2b]]
    %v2099 = vstv %s2098
    %v2100 = vmul.f32 %v2099, %v2086
    %v2101 = vmul.f32 %v2099, %v2087
    %v2104 = vrot.slane %v2101, 6
    %v2105 = vsel %vm188, %v2100, %v2104
    %v2107 = vadd.f32 %v2064, %v2105
    %s2108 = sld [smem:[#allocation6 + $0x46]]
    %v2109 = vstv %s2108
    %v2110 = vmul.f32 %v2109, %v2086
    %v2111 = vmul.f32 %v2109, %v2087
    %v2114 = vrot.slane %v2111, 6
    %v2115 = vsel %vm188, %v2110, %v2114
    %v2117 = vadd.f32 %v2074, %v2115
    %2118 = vst [vmem:[#allocation1] ss:$4 sm:$0xff] %v1221
    %v2119 = vld.sshfl [vmem:[#allocation1] sm:$0xff pattern:$0x73625140]
    %v2120 = vld.sshfl [vmem:[#allocation1 + $0x8] sm:$0xff pattern:$0x73625140]
    %2123 = vrot.lane.b32.xlu0 %v2119, 112
    %v2124 = vpop.permute.xlu0 %2123
    %2125 = vrot.lane.b32.xlu0 %v2120, 112
    %v2126 = vpop.permute.xlu0 %2125
    %v2127 = vsel %vm959, %v2124, %v2126
    %v2128 = vsel %vm959, %v2126, %v2124
    %v2129 = vmul.f32 %v2127, %v115
    %v2130 = vmul.f32 %v2128, %v116
    %s2131 = sld [smem:[#allocation6 + $0x19]]
    %v2132 = vstv %s2131
    %v2133 = vmul.f32 %v2132, %v2129
    %v2134 = vmul.f32 %v2132, %v2130
    %v2137 = vrot.slane %v2134, 6
    %v2138 = vsel %vm188, %v2133, %v2137
    %v2140 = vadd.f32 %v2097, %v2138
    %s2141 = sld [smem:[#allocation6 + $0x34]]
    %v2142 = vstv %s2141
    %v2143 = vmul.f32 %v2142, %v2129
    %v2144 = vmul.f32 %v2142, %v2130
    %v2147 = vrot.slane %v2144, 6
    %v2148 = vsel %vm188, %v2143, %v2147
    %v2150 = vadd.f32 %v2107, %v2148
    %s2151 = sld [smem:[#allocation6 + $0x4f]]
    %v2152 = vstv %s2151
    %v2153 = vmul.f32 %v2152, %v2129
    %v2154 = vmul.f32 %v2152, %v2130
    %v2157 = vrot.slane %v2154, 6
    %v2158 = vsel %vm188, %v2153, %v2157
    %v2160 = vadd.f32 %v2117, %v2158
    %2161 = vst [vmem:[#allocation1] ss:$4 sm:$0xff] %v1213
    %v2162 = vld.sshfl [vmem:[#allocation1] sm:$0xff pattern:$0x73625140]
    %v2163 = vld.sshfl [vmem:[#allocation1 + $0x8] sm:$0xff pattern:$0x73625140]
    %2166 = vrot.lane.b32.xlu0 %v2162, 111
    %v2167 = vpop.permute.xlu0 %2166
    %2168 = vrot.lane.b32.xlu0 %v2163, 111
    %v2169 = vpop.permute.xlu0 %2168
    %v2170 = vsel %vm1089, %v2167, %v2169
    %v2171 = vsel %vm1089, %v2169, %v2167
    %v2172 = vmul.f32 %v2170, %v122
    %v2173 = vmul.f32 %v2171, %v123
    %s2174 = sld [smem:[#allocation6 + $0x8]]
    %v2175 = vstv %s2174
    %v2176 = vmul.f32 %v2175, %v2172
    %v2177 = vmul.f32 %v2175, %v2173
    %v2180 = vrot.slane %v2177, 6
    %v2181 = vsel %vm188, %v2176, %v2180
    %v2183 = vadd.f32 %v2140, %v2181
    %s2184 = sld [smem:[#allocation6 + $0x23]]
    %v2185 = vstv %s2184
    %v2186 = vmul.f32 %v2185, %v2172
    %v2187 = vmul.f32 %v2185, %v2173
    %v2190 = vrot.slane %v2187, 6
    %v2191 = vsel %vm188, %v2186, %v2190
    %v2193 = vadd.f32 %v2150, %v2191
    %s2194 = sld [smem:[#allocation6 + $0x3e]]
    %v2195 = vstv %s2194
    %v2196 = vmul.f32 %v2195, %v2172
    %v2197 = vmul.f32 %v2195, %v2173
    %v2200 = vrot.slane %v2197, 6
    %v2201 = vsel %vm188, %v2196, %v2200
    %v2203 = vadd.f32 %v2160, %v2201
    %2204 = vst [vmem:[#allocation1] ss:$4 sm:$0xff] %v1217
    %v2205 = vld.sshfl [vmem:[#allocation1] sm:$0xff pattern:$0x73625140]
    %v2206 = vld.sshfl [vmem:[#allocation1 + $0x8] sm:$0xff pattern:$0x73625140]
    %2209 = vrot.lane.b32.xlu0 %v2205, 111
    %v2210 = vpop.permute.xlu0 %2209
    %2211 = vrot.lane.b32.xlu0 %v2206, 111
    %v2212 = vpop.permute.xlu0 %2211
    %v2213 = vsel %vm1089, %v2210, %v2212
    %v2214 = vsel %vm1089, %v2212, %v2210
    %v2215 = vmul.f32 %v2213, %v122
    %v2216 = vmul.f32 %v2214, %v123
    %s2217 = sld [smem:[#allocation6 + $0x11]]
    %v2218 = vstv %s2217
    %v2219 = vmul.f32 %v2218, %v2215
    %v2220 = vmul.f32 %v2218, %v2216
    %v2223 = vrot.slane %v2220, 6
    %v2224 = vsel %vm188, %v2219, %v2223
    %v2226 = vadd.f32 %v2183, %v2224
    %s2227 = sld [smem:[#allocation6 + $0x2c]]
    %v2228 = vstv %s2227
    %v2229 = vmul.f32 %v2228, %v2215
    %v2230 = vmul.f32 %v2228, %v2216
    %v2233 = vrot.slane %v2230, 6
    %v2234 = vsel %vm188, %v2229, %v2233
    %v2236 = vadd.f32 %v2193, %v2234
    %s2237 = sld [smem:[#allocation6 + $0x47]]
    %v2238 = vstv %s2237
    %v2239 = vmul.f32 %v2238, %v2215
    %v2240 = vmul.f32 %v2238, %v2216
    %v2243 = vrot.slane %v2240, 6
    %v2244 = vsel %vm188, %v2239, %v2243
    %v2246 = vadd.f32 %v2203, %v2244
    %2247 = vst [vmem:[#allocation1] ss:$4 sm:$0xff] %v1221
    %v2248 = vld.sshfl [vmem:[#allocation1] sm:$0xff pattern:$0x73625140]
    %v2249 = vld.sshfl [vmem:[#allocation1 + $0x8] sm:$0xff pattern:$0x73625140]
    %2252 = vrot.lane.b32.xlu0 %v2248, 111
    %v2253 = vpop.permute.xlu0 %2252
    %2254 = vrot.lane.b32.xlu0 %v2249, 111
    %v2255 = vpop.permute.xlu0 %2254
    %v2256 = vsel %vm1089, %v2253, %v2255
    %v2257 = vsel %vm1089, %v2255, %v2253
    %v2258 = vmul.f32 %v2256, %v122
    %v2259 = vmul.f32 %v2257, %v123
    %s2260 = sld [smem:[#allocation6 + $0x1a]]
    %v2261 = vstv %s2260
    %v2262 = vmul.f32 %v2261, %v2258
    %v2263 = vmul.f32 %v2261, %v2259
    %v2266 = vrot.slane %v2263, 6
    %v2267 = vsel %vm188, %v2262, %v2266
    %v2269 = vadd.f32 %v2226, %v2267
    %s2270 = sld [smem:[#allocation6 + $0x35]]
    %v2271 = vstv %s2270
    %v2272 = vmul.f32 %v2271, %v2258
    %v2273 = vmul.f32 %v2271, %v2259
    %v2276 = vrot.slane %v2273, 6
    %v2277 = vsel %vm188, %v2272, %v2276
    %v2279 = vadd.f32 %v2236, %v2277
    %s2280 = sld [smem:[#allocation6 + $0x50]]
    %v2281 = vstv %s2280
    %v2282 = vmul.f32 %v2281, %v2258
    %v2283 = vmul.f32 %v2281, %v2259
    %v2286 = vrot.slane %v2283, 6
    %v2287 = vsel %vm188, %v2282, %v2286
    %v2289 = vadd.f32 %v2246, %v2287
    %s2290 = sld [smem:[#allocation7]]
    %v2291 = vstv %s2290
    %v2292 = vadd.f32 %v2269, %v2291
    %v2293 = vmax.f32 %v2292, 0.0
    %v2294 = vadd.f32 %v2293, %v126
    %2295 = vst [vmem:[%s6] sm:$0xf] %v2294
    %s2296 = sld [smem:[#allocation7 + $0x1]]
    %v2297 = vstv %s2296
    %v2298 = vadd.f32 %v2279, %v2297
    %v2299 = vmax.f32 %v2298, 0.0
    %v2300 = vadd.f32 %v2299, %v128
    %s2301 = scalar_lea.vmem %s6, 4
    %2302 = vst [vmem:[%s2301] sm:$0xf] %v2300
    %s2303 = sld [smem:[#allocation7 + $0x2]]
    %v2304 = vstv %s2303
    %v2305 = vadd.f32 %v2289, %v2304
    %v2306 = vmax.f32 %v2305, 0.0
    %v2307 = vadd.f32 %v2306, %v130
    %s2308 = scalar_lea.vmem %s6, 8
    %2309 = vst [vmem:[%s2308] sm:$0xf] %v2307
    // Predicated region
    $region42: #{simple_residual_block.1} parent=1 // pred_check
      _
    $region43: #{simple_residual_block.1} parent=1 // pred_check_branch
      %2311 = sbr.rel (0) target = $region45
    $region44: #{simple_residual_block.1} parent=1 // pred_region
      _
    $region45: #{simple_residual_block.1} parent=1 // pred_fallthru
      _
    // Predicated region
    $region46: #{simple_residual_block.1} parent=1 // pred_check
      _
    $region47: #{simple_residual_block.1} parent=1 // pred_check_branch
      %2313 = sbr.rel (0) target = $region49
    $region48: #{simple_residual_block.1} parent=1 // pred_region
      _
    $region49: #{simple_residual_block.1} parent=1 // pred_fallthru
      _
    %2314 = vsyncpa [#allocation3], 1
    %2315 = vsyncpa [#allocation5], 1
    %2316 = vsyncpa [#allocation8], 1

</llo_original>
